<compile_context>
chip_gen: v7x
topology: tpu7x:2x2x1
jax: 0.10.0
libtpu: 0.0.40
codegen_flags: <defaults>
</compile_context>

<pallas_src>
import jax
import jax.numpy as jnp
from jax.experimental import pallas as pl
from jax.experimental.pallas import tpu as pltpu


TASKS = ("semseg", "depth")
ALL_STAGES = ("stage1", "stage2")
NDDR_STAGES = ("stage1", "stage2")
STAGE_CHANNELS = {"stage1": 4, "stage2": 8}
STAGE_STRIDE = {"stage1": 1, "stage2": 2}
IN_CHANNELS = 4
HEAD_OUT_CHANNELS = 4
ALPHA, BETA = 0.9, 0.1
BN_EPS = 1e-5  # nn.BatchNorm2d default eps


# ----------------------------------------------------------------------------
# Parameters (raw, per-task -- mirrors the PyTorch module layout).
# Conv weights are stored torch-style (C_out, C_in); BN params mirror the
# module's initialization (gamma=1, beta=0, running_mean=0, running_var=1).
# ----------------------------------------------------------------------------
def make_raw_params(key):
    params = {"backbone": {}, "heads": {}, "nddr_bn": {}}
    cin = IN_CHANNELS
    for stage in ALL_STAGES:
        cout = STAGE_CHANNELS[stage]
        params["backbone"][stage] = {}
        for task in TASKS:
            key, sub = jax.random.split(key)
            params["backbone"][stage][task] = (
                0.2 * jax.random.normal(sub, (cout, cin), dtype=jnp.float32))
        cin = cout
    for stage in NDDR_STAGES:
        c = STAGE_CHANNELS[stage]
        params["nddr_bn"][stage] = {
            task: {"gamma": jnp.ones((c,), jnp.float32),
                   "beta": jnp.zeros((c,), jnp.float32),
                   "mean": jnp.zeros((c,), jnp.float32),
                   "var": jnp.ones((c,), jnp.float32)}
            for task in TASKS}
    for task in TASKS:
        key, sub = jax.random.split(key)
        params["heads"][task] = 0.2 * jax.random.normal(
            sub, (HEAD_OUT_CHANNELS, STAGE_CHANNELS[ALL_STAGES[-1]]),
            dtype=jnp.float32)
    return params


def _nddr_fused(channels, bn):
    """Stacked (T*C, T*C) NDDR weight (alpha on own block, beta*I elsewhere) with
    eval-mode BatchNorm folded as a per-output-channel row scale, plus the folded
    bias vector (T*C,)."""
    t = len(TASKS)
    eye = jnp.eye(channels, dtype=jnp.float32)
    w_rows, b_rows = [], []
    for i, task in enumerate(TASKS):
        w_conv = jnp.concatenate(
            [ALPHA * eye if j == i else BETA * eye for j in range(t)], axis=1)
        p = bn[task]
        scale = p["gamma"] / jnp.sqrt(p["var"] + BN_EPS)          # (C,)
        w_rows.append(w_conv * scale[:, None])
        b_rows.append(p["beta"] - p["mean"] * scale)
    return jnp.concatenate(w_rows, axis=0), jnp.concatenate(b_rows, axis=0)


def _block_diag(mats):
    rows = sum(m.shape[0] for m in mats)
    cols = sum(m.shape[1] for m in mats)
    out = jnp.zeros((rows, cols), jnp.float32)
    r = c = 0
    for m in mats:
        out = out.at[r:r + m.shape[0], c:c + m.shape[1]].set(m)
        r += m.shape[0]
        c += m.shape[1]
    return out


def _pack_params(raw, h, w):
    """Pack ALL small constants (fused conv/NDDR/head weights, folded BN biases,
    and the two separable spatial constants) into one padded (rows, 16) operand."""
    ws = w // STAGE_STRIDE["stage2"]
    # stage1: both tasks read the same input -> stack weight rows
    w1 = jnp.concatenate([raw["backbone"]["stage1"][t] for t in TASKS], axis=0)
    wn1, b1 = _nddr_fused(STAGE_CHANNELS["stage1"], raw["nddr_bn"]["stage1"])
    # stage2 / heads: each task reads its own channel block -> block-diagonal
    w2 = _block_diag([raw["backbone"]["stage2"][t] for t in TASKS])
    wn2, b2 = _nddr_fused(STAGE_CHANNELS["stage2"], raw["nddr_bn"]["stage2"])
    wh = _block_diag([raw["heads"][t] for t in TASKS])
    # separable spatial constants (bf16-exact values; cast here for bf16 MXU runs)
    sw = jnp.zeros((ws, w), jnp.float32).at[
        jnp.arange(ws), 2 * jnp.arange(ws)].set(1.0)          # stride-2 col select
    rw = jax.image.resize(jnp.eye(ws, dtype=jnp.float32), (w, ws),
                          method="bilinear")                  # bilinear col upsample
    blocks = {"w1": w1, "wn1": wn1, "b1": b1[:, None],
              "w2": w2, "wn2": wn2, "b2": b2[:, None],
              "wh": wh, "sw": sw, "rw": rw}
    ncols = max(b.shape[1] for b in blocks.values())
    layout, rows, row = {}, [], 0
    for name, b in blocks.items():
        r = b.shape[0]
        r_pad = -(-r // 8) * 8                                # keep 8-row alignment
        layout[name] = (row, r, b.shape[1])
        rows.append(jnp.pad(b.astype(jnp.float32),
                            ((0, r_pad - r), (0, ncols - b.shape[1]))))
        row += r_pad
    return jnp.concatenate(rows, axis=0), layout


# ----------------------------------------------------------------------------
# Fused kernel: one grid step == one image; all intermediates VMEM/vreg resident.
# ----------------------------------------------------------------------------
def _make_kernel(layout, h, w):
    hs, ws = h // 2, w // 2
    t = len(TASKS)
    tc1 = t * STAGE_CHANNELS["stage1"]
    tc2 = t * STAGE_CHANNELS["stage2"]
    tch = t * HEAD_OUT_CHANNELS

    def sl(ref, name):
        r0, nr, nc = layout[name]
        return ref[r0:r0 + nr, 0:nc]

    def kernel(x_ref, wp_ref, o_ref):
        f32 = jnp.float32
        w1, wn1, b1 = sl(wp_ref, "w1"), sl(wp_ref, "wn1"), sl(wp_ref, "b1")
        w2, wn2, b2 = sl(wp_ref, "w2"), sl(wp_ref, "wn2"), sl(wp_ref, "b2")
        wh, swm, rwm = sl(wp_ref, "wh"), sl(wp_ref, "sw"), sl(wp_ref, "rw")

        x = x_ref[0]                                              # (Cin, H*W), lane-dense
        # stage-1 1x1 convs, both tasks at once: (2C1, Cin) @ (Cin, HW)
        y = jnp.maximum(jnp.dot(w1, x, preferred_element_type=f32), 0.0)
        # NDDR-1 (stacked per-task convs over concatenated features; BN folded)
        y = jnp.maximum(jnp.dot(wn1, y, preferred_element_type=f32) + b1, 0.0)

        # ---- stride-2 subsample: separable, no dense (HW x HW) matrix ----
        yt = y.T.reshape(h, w, tc1)                               # (H, W, C) view
        swb = jnp.broadcast_to(swm, (h, ws, w))
        yt = jnp.einsum("hsw,hwc->hsc", swb, yt)                  # cols: (Ws, W) select
        yt = yt.reshape(hs, 2, ws, tc1)[:, 0]                     # rows: keep even (no FLOPs)
        y = yt.reshape(hs * ws, tc1).T                            # (2C1, Hs*Ws)

        # stage-2 convs (block-diagonal over tasks) + ReLU
        y = jnp.maximum(jnp.dot(w2, y, preferred_element_type=f32), 0.0)
        # NDDR-2
        y = jnp.maximum(jnp.dot(wn2, y, preferred_element_type=f32) + b2, 0.0)
        # heads (block-diagonal), no activation
        y = jnp.dot(wh, y, preferred_element_type=f32)            # (2Ch, Hs*Ws)

        # ---- bilinear x2 upsample (align_corners=False), separable ----
        yt = y.T.reshape(hs, ws, tch)                             # (Hs, Ws, C) view
        rwb = jnp.broadcast_to(rwm, (hs, w, ws))
        yt = jnp.einsum("hws,hsc->hwc", rwb, yt)                  # cols: (W, Ws) matmul
        prev_row = jnp.concatenate([yt[:1], yt[:-1]], axis=0)     # clamp edges
        next_row = jnp.concatenate([yt[1:], yt[-1:]], axis=0)
        even = 0.75 * yt + 0.25 * prev_row                        # rows: 2-tap filter
        odd = 0.75 * yt + 0.25 * next_row
        yt = jnp.stack([even, odd], axis=1).reshape(h, w, tch)    # interleave rows

        # lane-dense (2Ch, H*W) store; already NCHW-ordered for this image
        o_ref[0] = yt.reshape(h * w, tch).T.astype(o_ref.dtype)

    return kernel


# ----------------------------------------------------------------------------
# Fused Pallas forward
# ----------------------------------------------------------------------------
def nddr_cnn_forward(x, raw_params):
    n, cin, h, w = x.shape
    hw = h * w
    tch = len(TASKS) * HEAD_OUT_CHANNELS
    pack, layout = _pack_params(raw_params, h, w)
    kernel = _make_kernel(layout, h, w)

    # per-image blocks; NCHW per image is already (C, H*W) -> free relayout
    x3 = x.reshape(n, cin, hw).astype(jnp.float32)

    # vmem limit from the real per-step footprint (double-buffered in/out blocks,
    # the single weight pack, plus generous headroom for small f32 intermediates).
    step_bytes = 2 * cin * hw * 4 + 2 * tch * hw * 4 + pack.size * 4
    vmem_limit = int(max(4 * 1024 * 1024, 8 * step_bytes))

    out = pl.pallas_call(
        kernel,
        out_shape=jax.ShapeDtypeStruct((n, tch, hw), jnp.float32),
        grid_spec=pltpu.PrefetchScalarGridSpec(
            num_scalar_prefetch=0,
            grid=(n,),                                          # one image per step
            in_specs=[
                pl.BlockSpec((1, cin, hw), lambda i: (i, 0, 0)),
                pl.BlockSpec(pack.shape, lambda i: (0, 0)),     # single packed consts
            ],
            out_specs=pl.BlockSpec((1, tch, hw), lambda i: (i, 0, 0)),
        ),
        compiler_params=pltpu.CompilerParams(
            dimension_semantics=("parallel",),                  # megacore-shardable
            vmem_limit_bytes=vmem_limit,
        ),
    )(x3, pack)

    # free reshape back to NCHW, then per-task channel split
    y = out.reshape(n, tch, h, w)
    c = HEAD_OUT_CHANNELS
    # TODO(synk): at realistic H,W add a second "parallel" grid axis over output-row
    # tiles (with a small halo for the bilinear row filter) to cap per-step VMEM and
    # shard v7x's two TensorCores beyond the batch axis.
    return {t: y[:, i * c:(i + 1) * c] for i, t in enumerate(TASKS)}


# ----------------------------------------------------------------------------
# Pure-JAX reference that mirrors the PyTorch module op-by-op (for checking)
# ----------------------------------------------------------------------------
def nddr_cnn_forward_ref(x, raw):
    img_size = x.shape[-2:]
    feats = {t: x for t in TASKS}
    for stage in ALL_STAGES:
        stride = STAGE_STRIDE[stage]
        for t in TASKS:
            xi = feats[t]
            if stride != 1:
                xi = xi[:, :, ::stride, ::stride]
            wt = raw["backbone"][stage][t]                        # (Cout, Cin)
            feats[t] = jax.nn.relu(
                jnp.einsum("nchw,oc->nohw", xi, wt, precision="highest"))
        if stage in NDDR_STAGES:
            c = STAGE_CHANNELS[stage]
            xcat = jnp.concatenate([feats[t] for t in TASKS], axis=1)
            eye = jnp.eye(c, dtype=jnp.float32)
            new = {}
            for i, t in enumerate(TASKS):
                w_conv = jnp.concatenate(
                    [ALPHA * eye if j == i else BETA * eye
                     for j in range(len(TASKS))], axis=1)         # (C, T*C)
                y = jnp.einsum("nchw,oc->nohw", xcat, w_conv, precision="highest")
                p = raw["nddr_bn"][stage][t]
                scale = p["gamma"] / jnp.sqrt(p["var"] + BN_EPS)
                bias = p["beta"] - p["mean"] * scale
                y = y * scale[None, :, None, None] + bias[None, :, None, None]
                new[t] = jax.nn.relu(y)
            feats = new
    out = {}
    for t in TASKS:
        wt = raw["heads"][t]
        o = jnp.einsum("nchw,oc->nohw", feats[t], wt, precision="highest")
        out[t] = jax.image.resize(
            o, (o.shape[0], o.shape[1], img_size[0], img_size[1]),
            method="bilinear")
    return out


if __name__ == "__main__":
    key = jax.random.PRNGKey(0)
    key, xkey = jax.random.split(key)
    x = jax.random.normal(xkey, (2, IN_CHANNELS, 16, 16), dtype=jnp.float32)
    raw = make_raw_params(key)

    fwd = jax.jit(nddr_cnn_forward)
    out = fwd(x, raw)
    for t in TASKS:
        jax.block_until_ready(out[t])
        assert out[t].shape == (2, HEAD_OUT_CHANNELS, 16, 16)

    # full-forward correctness check against the op-by-op plain-JAX reference
    ref = nddr_cnn_forward_ref(x, raw)
    for t in TASKS:
        err = float(jnp.max(jnp.abs(out[t] - ref[t])))
        assert jnp.allclose(out[t], ref[t], atol=1e-4, rtol=1e-4), (t, err)

    print("KERNEL_OK")
</pallas_src>

<mosaic_0001>
module attributes {stable_mosaic.version = 11 : i64} {
  func.func @kernel(%arg0: i32, %arg1: memref<1x4x256xf32, #tpu.memory_space<vmem>>, %arg2: memref<104x16xf32, #tpu.memory_space<vmem>>, %arg3: memref<1x8x256xf32, #tpu.memory_space<vmem>>) attributes {dimension_semantics = [#tpu.dimension_semantics<parallel>], iteration_bounds = array<i64: 2>, scalar_prefetch = 0 : i64, scratch_operands = 0 : i64, tpu.core_type = #tpu.core_type<tc>, window_params = [{transform_indices = @transform_0, window_bounds = array<i64: 1, 4, 256>}, {pipeline_mode = #tpu.pipeline_mode<synchronous>, transform_indices = @transform_1, window_bounds = array<i64: 104, 16>}, {transform_indices = @transform_2, window_bounds = array<i64: 1, 8, 256>}]} {
    %c0 = arith.constant 0 : index
    %c0_0 = arith.constant 0 : index
    %0 = vector.load %arg2[%c0, %c0_0] : memref<104x16xf32, #tpu.memory_space<vmem>>, vector<8x4xf32>
    %c8 = arith.constant 8 : index
    %c0_1 = arith.constant 0 : index
    %1 = vector.load %arg2[%c8, %c0_1] : memref<104x16xf32, #tpu.memory_space<vmem>>, vector<8x8xf32>
    %c16 = arith.constant 16 : index
    %c0_2 = arith.constant 0 : index
    %2 = vector.load %arg2[%c16, %c0_2] : memref<104x16xf32, #tpu.memory_space<vmem>>, vector<8x1xf32>
    %c24 = arith.constant 24 : index
    %c0_3 = arith.constant 0 : index
    %3 = vector.load %arg2[%c24, %c0_3] : memref<104x16xf32, #tpu.memory_space<vmem>>, vector<16x8xf32>
    %c40 = arith.constant 40 : index
    %c0_4 = arith.constant 0 : index
    %4 = vector.load %arg2[%c40, %c0_4] : memref<104x16xf32, #tpu.memory_space<vmem>>, vector<16x16xf32>
    %c56 = arith.constant 56 : index
    %c0_5 = arith.constant 0 : index
    %5 = vector.load %arg2[%c56, %c0_5] : memref<104x16xf32, #tpu.memory_space<vmem>>, vector<16x1xf32>
    %c72 = arith.constant 72 : index
    %c0_6 = arith.constant 0 : index
    %6 = vector.load %arg2[%c72, %c0_6] : memref<104x16xf32, #tpu.memory_space<vmem>>, vector<8x16xf32>
    %c80 = arith.constant 80 : index
    %c0_7 = arith.constant 0 : index
    %7 = vector.load %arg2[%c80, %c0_7] : memref<104x16xf32, #tpu.memory_space<vmem>>, vector<8x16xf32>
    %c88 = arith.constant 88 : index
    %c0_8 = arith.constant 0 : index
    %8 = vector.load %arg2[%c88, %c0_8] : memref<104x16xf32, #tpu.memory_space<vmem>>, vector<16x8xf32>
    %c0_9 = arith.constant 0 : index
    %c0_10 = arith.constant 0 : index
    %c0_11 = arith.constant 0 : index
    %9 = vector.load %arg1[%c0_9, %c0_10, %c0_11] : memref<1x4x256xf32, #tpu.memory_space<vmem>>, vector<1x4x256xf32>
    %10 = vector.shape_cast %9 : vector<1x4x256xf32> to vector<4x256xf32>
    %cst = arith.constant dense<0.000000e+00> : vector<8x256xf32>
    %11 = tpu.matmul %0, %10, %cst {dimension_numbers = #tpu.dot_dimension_numbers<[1], [0], [0], [1], [0, 0, 1, 1], [], []>} : vector<8x4xf32>, vector<4x256xf32>, vector<8x256xf32> -> vector<8x256xf32>
    %cst_12 = arith.constant 0.000000e+00 : f32
    %12 = vector.broadcast %cst_12 : f32 to vector<8x256xf32>
    %13 = arith.maximumf %11, %12 : vector<8x256xf32>
    %cst_13 = arith.constant dense<0.000000e+00> : vector<8x256xf32>
    %14 = tpu.matmul %1, %13, %cst_13 {dimension_numbers = #tpu.dot_dimension_numbers<[1], [0], [0], [1], [0, 0, 1, 1], [], []>} : vector<8x8xf32>, vector<8x256xf32>, vector<8x256xf32> -> vector<8x256xf32>
    %15 = vector.broadcast %2 : vector<8x1xf32> to vector<8x256xf32>
    %16 = arith.addf %14, %15 : vector<8x256xf32>
    %cst_14 = arith.constant 0.000000e+00 : f32
    %17 = vector.broadcast %cst_14 : f32 to vector<8x256xf32>
    %18 = arith.maximumf %16, %17 : vector<8x256xf32>
    %19 = tpu.transpose %18, [1, 0] : vector<8x256xf32> -> vector<256x8xf32>
    %20 = vector.shape_cast %19 : vector<256x8xf32> to vector<16x16x8xf32>
    %21 = vector.shape_cast %7 : vector<8x16xf32> to vector<1x8x16xf32>
    %22 = vector.broadcast %21 : vector<1x8x16xf32> to vector<16x8x16xf32>
    "tpu.trace_start"() <{level = 10 : i32, message = "hsw,hwc->hsc"}> : () -> ()
    %cst_15 = arith.constant dense<0.000000e+00> : vector<16x8x8xf32>
    %23 = tpu.matmul %22, %20, %cst_15 {dimension_numbers = #tpu.dot_dimension_numbers<[2], [1], [1], [2], [0, 0, 0, 1, 1, 2], [0], [0]>} : vector<16x8x16xf32>, vector<16x16x8xf32>, vector<16x8x8xf32> -> vector<16x8x8xf32>
    "tpu.trace_stop"() : () -> ()
    %24 = vector.shape_cast %23 : vector<16x8x8xf32> to vector<8x2x8x8xf32>
    %25 = vector.extract_strided_slice %24 {offsets = [0, 0, 0, 0], sizes = [8, 1, 8, 8], strides = [1, 1, 1, 1]} : vector<8x2x8x8xf32> to vector<8x1x8x8xf32>
    %26 = vector.shape_cast %25 : vector<8x1x8x8xf32> to vector<8x8x8xf32>
    %27 = vector.shape_cast %26 : vector<8x8x8xf32> to vector<64x8xf32>
    %28 = tpu.transpose %27, [1, 0] : vector<64x8xf32> -> vector<8x64xf32>
    %cst_16 = arith.constant dense<0.000000e+00> : vector<16x64xf32>
    %29 = tpu.matmul %3, %28, %cst_16 {dimension_numbers = #tpu.dot_dimension_numbers<[1], [0], [0], [1], [0, 0, 1, 1], [], []>} : vector<16x8xf32>, vector<8x64xf32>, vector<16x64xf32> -> vector<16x64xf32>
    %cst_17 = arith.constant 0.000000e+00 : f32
    %30 = vector.broadcast %cst_17 : f32 to vector<16x64xf32>
    %31 = arith.maximumf %29, %30 : vector<16x64xf32>
    %cst_18 = arith.constant dense<0.000000e+00> : vector<16x64xf32>
    %32 = tpu.matmul %4, %31, %cst_18 {dimension_numbers = #tpu.dot_dimension_numbers<[1], [0], [0], [1], [0, 0, 1, 1], [], []>} : vector<16x16xf32>, vector<16x64xf32>, vector<16x64xf32> -> vector<16x64xf32>
    %33 = vector.broadcast %5 : vector<16x1xf32> to vector<16x64xf32>
    %34 = arith.addf %32, %33 : vector<16x64xf32>
    %cst_19 = arith.constant 0.000000e+00 : f32
    %35 = vector.broadcast %cst_19 : f32 to vector<16x64xf32>
    %36 = arith.maximumf %34, %35 : vector<16x64xf32>
    %cst_20 = arith.constant dense<0.000000e+00> : vector<8x64xf32>
    %37 = tpu.matmul %6, %36, %cst_20 {dimension_numbers = #tpu.dot_dimension_numbers<[1], [0], [0], [1], [0, 0, 1, 1], [], []>} : vector<8x16xf32>, vector<16x64xf32>, vector<8x64xf32> -> vector<8x64xf32>
    %38 = tpu.transpose %37, [1, 0] : vector<8x64xf32> -> vector<64x8xf32>
    %39 = vector.shape_cast %38 : vector<64x8xf32> to vector<8x8x8xf32>
    %40 = vector.shape_cast %8 : vector<16x8xf32> to vector<1x16x8xf32>
    %41 = vector.broadcast %40 : vector<1x16x8xf32> to vector<8x16x8xf32>
    "tpu.trace_start"() <{level = 10 : i32, message = "hws,hsc->hwc"}> : () -> ()
    %cst_21 = arith.constant dense<0.000000e+00> : vector<8x16x8xf32>
    %42 = tpu.matmul %41, %39, %cst_21 {dimension_numbers = #tpu.dot_dimension_numbers<[2], [1], [1], [2], [0, 0, 0, 1, 1, 2], [0], [0]>} : vector<8x16x8xf32>, vector<8x8x8xf32>, vector<8x16x8xf32> -> vector<8x16x8xf32>
    "tpu.trace_stop"() : () -> ()
    %43 = vector.extract_strided_slice %42 {offsets = [0, 0, 0], sizes = [1, 16, 8], strides = [1, 1, 1]} : vector<8x16x8xf32> to vector<1x16x8xf32>
    %44 = vector.extract_strided_slice %42 {offsets = [0, 0, 0], sizes = [7, 16, 8], strides = [1, 1, 1]} : vector<8x16x8xf32> to vector<7x16x8xf32>
    %45 = tpu.concatenate %43, %44 in 0 : vector<1x16x8xf32>, vector<7x16x8xf32> -> vector<8x16x8xf32>
    %46 = vector.extract_strided_slice %42 {offsets = [1, 0, 0], sizes = [7, 16, 8], strides = [1, 1, 1]} : vector<8x16x8xf32> to vector<7x16x8xf32>
    %47 = vector.extract_strided_slice %42 {offsets = [7, 0, 0], sizes = [1, 16, 8], strides = [1, 1, 1]} : vector<8x16x8xf32> to vector<1x16x8xf32>
    %48 = tpu.concatenate %46, %47 in 0 : vector<7x16x8xf32>, vector<1x16x8xf32> -> vector<8x16x8xf32>
    %cst_22 = arith.constant 7.500000e-01 : f32
    %49 = vector.broadcast %cst_22 : f32 to vector<8x16x8xf32>
    %50 = arith.mulf %49, %42 : vector<8x16x8xf32>
    %cst_23 = arith.constant 2.500000e-01 : f32
    %51 = vector.broadcast %cst_23 : f32 to vector<8x16x8xf32>
    %52 = arith.mulf %51, %45 : vector<8x16x8xf32>
    %53 = arith.addf %50, %52 : vector<8x16x8xf32>
    %cst_24 = arith.constant 7.500000e-01 : f32
    %54 = vector.broadcast %cst_24 : f32 to vector<8x16x8xf32>
    %55 = arith.mulf %54, %42 : vector<8x16x8xf32>
    %cst_25 = arith.constant 2.500000e-01 : f32
    %56 = vector.broadcast %cst_25 : f32 to vector<8x16x8xf32>
    %57 = arith.mulf %56, %48 : vector<8x16x8xf32>
    %58 = arith.addf %55, %57 : vector<8x16x8xf32>
    %59 = vector.shape_cast %53 : vector<8x16x8xf32> to vector<8x1x16x8xf32>
    %60 = vector.shape_cast %58 : vector<8x16x8xf32> to vector<8x1x16x8xf32>
    %61 = tpu.concatenate %59, %60 in 1 : vector<8x1x16x8xf32>, vector<8x1x16x8xf32> -> vector<8x2x16x8xf32>
    %62 = vector.shape_cast %61 : vector<8x2x16x8xf32> to vector<16x16x8xf32>
    %63 = vector.shape_cast %62 : vector<16x16x8xf32> to vector<256x8xf32>
    %64 = tpu.transpose %63, [1, 0] : vector<256x8xf32> -> vector<8x256xf32>
    %c0_26 = arith.constant 0 : index
    %c0_27 = arith.constant 0 : index
    %c0_28 = arith.constant 0 : index
    %65 = vector.load %arg3[%c0_26, %c0_27, %c0_28] : memref<1x8x256xf32, #tpu.memory_space<vmem>>, vector<1x8x256xf32>
    %66 = vector.shape_cast %65 : vector<1x8x256xf32> to vector<8x256xf32>
    %67 = vector.shape_cast %64 : vector<8x256xf32> to vector<1x8x256xf32>
    tpu.vector_store %arg3[%c0_26, %c0_27, %c0_28], %67 {strides = array<i32>} : memref<1x8x256xf32, #tpu.memory_space<vmem>>, vector<1x8x256xf32>,
    return
  }
  func.func @transform_0(%arg0: i32) -> (i32, i32, i32) {
    %c0_i32 = arith.constant 0 : i32
    %c0_i32_0 = arith.constant 0 : i32
    %c0_i32_1 = arith.constant 0 : i32
    return %arg0, %c0_i32, %c0_i32_0 : i32, i32, i32
  }
  func.func @transform_1(%arg0: i32) -> (i32, i32) {
    %c0_i32 = arith.constant 0 : i32
    %c0_i32_0 = arith.constant 0 : i32
    %c0_i32_1 = arith.constant 0 : i32
    return %c0_i32, %c0_i32_0 : i32, i32
  }
  func.func @transform_2(%arg0: i32) -> (i32, i32, i32) {
    %c0_i32 = arith.constant 0 : i32
    %c0_i32_0 = arith.constant 0 : i32
    %c0_i32_1 = arith.constant 0 : i32
    return %arg0, %c0_i32, %c0_i32_0 : i32, i32, i32
  }
}

</mosaic_0001>

<llo_original>
// kernel: nddr_cnn_forward.1
$region0: #{nddr_cnn_forward.1}
  #allocation0 [shape = 'u32[]', space=smem, size = 0x4, offset = 0x4, fixed_abs, tag = 'smem constant byte address 0x4 - core index']
  #allocation1 [shape = 'u32[144,128]{1,0:T(1,128)}', space=vmem, size = 0x12000, scoped, tag = 'internal scratch']
  %s0 = inlined_call_operand.vmem [shape: f32[2,4,256], index: 0, kind: input, shape index: {}]
  %s1 = inlined_call_operand.vmem [shape: f32[104,16], index: 1, kind: input, shape index: {}]
  %s2 = inlined_call_operand.vmem [shape: f32[2,8,256], index: 2, kind: output, shape index: {}]
  %s3 = sld [smem:[#allocation0]]
  $region41: #{nddr_cnn_forward.1} parent=0
    _
  %s5 = ssub.s32 1, %s3
  %s6 = scalar_select 0, %s5, %s3
  loop: start=0, step=1, limit=4
  $region2: #{nddr_cnn_forward.1} parent=0 // loop_pre_header
    _
  $region3: #{nddr_cnn_forward.1} parent=0 // loop_header
    %s8 = sphi 0, %s12
    %p9 = scmp.ge.s32.totalorder %s8, 4
    %s18 = sphi 0, %s20
    %s21 = sphi 0, %s18
    %s22 = sphi 0, %s21
    %s38 = sphi 0, %s22
    %s42 = sphi 0, %s42
    %s44 = sphi 0, %s42
    %s45 = sphi 0, %s44
    %s59 = sphi 0, %s45
    %s65 = sphi 0, %s67
    %s68 = sphi 0, %s65
    %s69 = sphi 0, %s68
    %s85 = sphi 0, %s69
  $region4: #{nddr_cnn_forward.1} parent=0 // loop_header_branch
    %11 = sbr.rel (%p9) target = $region8
  $region5: #{nddr_cnn_forward.1} parent=0 // loop_body
    %s13 = ssub.s32 %s8, 1
    %s14 = ssub.s32 %s8, 2
    %s15 = sadd.s32 %s8, 1
    %s16 = ssub.s32 %s8, %s15
    %p17 = scmp.eq.s32.totalorder %s16, 0
    %s19 = sadd.s32 %s18, 1
    %s20 = scalar_select %p17, %s18, %s19
    %p23 = pneg %p17
    %p24 = scmp.eq.s32.totalorder %s8, 1
    %p25 = por %p23, %p24
    %p26 = scmp.ne.s32.totalorder %s18, %s21
    %p27 = scmp.eq.s32.totalorder %s8, 0
    %p28 = por %p26, %p27
    %p29 = scmp.ne.s32.totalorder %s18, %s21
    %p30 = scmp.eq.s32.totalorder %s13, 1
    %p31 = por %p29, %p30
    %p32 = scmp.ne.s32.totalorder %s21, %s22
    %p33 = scmp.eq.s32.totalorder %s13, 0
    %p34 = por %p32, %p33
    %p35 = scmp.ne.s32.totalorder %s21, %s22
    %p36 = scmp.eq.s32.totalorder %s14, 1
    %p37 = por %p35, %p36
    %p39 = scmp.ne.s32.totalorder %s22, %s38
    %p40 = scmp.eq.s32.totalorder %s14, 0
    %p41 = por %p39, %p40
    %s43 = sadd.s32 %s42, 1
    %p46 = scmp.eq.s32.totalorder %s8, 1
    %p47 = scmp.ne.s32.totalorder %s42, %s44
    %p48 = scmp.eq.s32.totalorder %s8, 0
    %p49 = por %p47, %p48
    %p50 = scmp.ne.s32.totalorder %s42, %s44
    %p51 = scmp.eq.s32.totalorder %s13, 1
    %p52 = por %p50, %p51
    %p53 = scmp.ne.s32.totalorder %s44, %s45
    %p54 = scmp.eq.s32.totalorder %s13, 0
    %p55 = por %p53, %p54
    %p56 = scmp.ne.s32.totalorder %s44, %s45
    %p57 = scmp.eq.s32.totalorder %s14, 1
    %p58 = por %p56, %p57
    %p60 = scmp.ne.s32.totalorder %s45, %s59
    %p61 = scmp.eq.s32.totalorder %s14, 0
    %p62 = por %p60, %p61
    %s63 = ssub.s32 %s8, %s15
    %p64 = scmp.eq.s32.totalorder %s63, 0
    %s66 = sadd.s32 %s65, 1
    %s67 = scalar_select %p64, %s65, %s66
    %p70 = pneg %p64
    %p71 = scmp.eq.s32.totalorder %s8, 1
    %p72 = por %p70, %p71
    %p73 = scmp.ne.s32.totalorder %s65, %s68
    %p74 = scmp.eq.s32.totalorder %s8, 0
    %p75 = por %p73, %p74
    %p76 = scmp.ne.s32.totalorder %s65, %s68
    %p77 = scmp.eq.s32.totalorder %s13, 1
    %p78 = por %p76, %p77
    %p79 = scmp.ne.s32.totalorder %s68, %s69
    %p80 = scmp.eq.s32.totalorder %s13, 0
    %p81 = por %p79, %p80
    %p82 = scmp.ne.s32.totalorder %s68, %s69
    %p83 = scmp.eq.s32.totalorder %s14, 1
    %p84 = por %p82, %p83
    %p86 = scmp.ne.s32.totalorder %s69, %s85
    %p87 = scmp.eq.s32.totalorder %s14, 0
    %p88 = por %p86, %p87
    %p89 = scmp.le.s32.totalorder 1, %s8
    %p90 = scmp.lt.s32.totalorder %s8, 3
    %p91 = pnand %p89, %p90
    %p92 = pneg %p91
    // Predicated region
    $region9: #{nddr_cnn_forward.1} parent=5 // pred_check
      _
    $region10: #{nddr_cnn_forward.1} parent=5 // pred_check_branch
      %94 = sbr.rel (%p91) target = $region12
    $region11: #{nddr_cnn_forward.1} parent=5 // pred_region
      %s95 = ssub.s32 %s8, 1
      // Predicated region
      $region13: #{nddr_cnn_forward.1} parent=11 // pred_check
        %p96 = pneg %p55
      $region14: #{nddr_cnn_forward.1} parent=11 // pred_check_branch
        %98 = sbr.rel (%p96) target = $region16
      $region15: #{nddr_cnn_forward.1} parent=11 // pred_region
        _
      $region16: #{nddr_cnn_forward.1} parent=11 // pred_fallthru
        _
    $region12: #{nddr_cnn_forward.1} parent=5 // pred_fallthru
      _
    %p99 = scmp.lt.s32.totalorder %s8, 2
    // Predicated region
    $region17: #{nddr_cnn_forward.1} parent=5 // pred_check
      %p100 = pneg %p99
    $region18: #{nddr_cnn_forward.1} parent=5 // pred_check_branch
      %102 = sbr.rel (%p100) target = $region20
    $region19: #{nddr_cnn_forward.1} parent=5 // pred_region
      // Predicated region
      $region21: #{nddr_cnn_forward.1} parent=19 // pred_check
        %p103 = pneg %p28
      $region22: #{nddr_cnn_forward.1} parent=19 // pred_check_branch
        %105 = sbr.rel (%p103) target = $region24
      $region23: #{nddr_cnn_forward.1} parent=19 // pred_region
        %p106 = scmp.lt.s32.totalorder %s8, 1
        %s107 = scalar_select %p106, %s8, 1
        %s108 = smul.addr %s107, 2
        %s109 = smul.addr %s108, 4
        %s110 = scalar_lea.vmem %s0, %s109
      $region24: #{nddr_cnn_forward.1} parent=19 // pred_fallthru
        _
    $region20: #{nddr_cnn_forward.1} parent=5 // pred_fallthru
      _
    %p111 = scmp.le.s32.totalorder 1, %s8
    %p112 = scmp.lt.s32.totalorder %s8, 3
    %p113 = pnand %p111, %p112
    %p114 = pneg %p113
    // Predicated region
    $region25: #{nddr_cnn_forward.1} parent=5 // pred_check
      _
    $region26: #{nddr_cnn_forward.1} parent=5 // pred_check_branch
      %116 = sbr.rel (%p113) target = $region28
    $region27: #{nddr_cnn_forward.1} parent=5 // pred_region
      %s117 = ssub.s32 %s8, 1
      %p118 = scmp.lt.s32.totalorder %s13, 1
      %s119 = scalar_select %p118, %s13, 1
      %s120 = smul.addr %s119, 2
      %s121 = smul.addr %s120, 4
      %s122 = scalar_lea.vmem %s0, %s121
      %p123 = pneg %p34
      %p124 = pneg %p31
      %p125 = pneg %p55
      %p126 = pneg %p52
      %p127 = pneg %p81
      %p128 = pneg %p78
      %p129 = scmp.lt.s32.totalorder %s13, 1
      %s130 = scalar_select %p129, %s13, 1
      %s131 = smul.addr %s130, 2
      %s132 = smul.addr %s131, 8
      %s133 = scalar_lea.vmem %s2, %s132
      %p134 = scmp.lt.s32.totalorder %s13, 1
      %s135 = scalar_select %p134, %s13, 1
      %s136 = smul.addr %s135, 2
      %s137 = smul.addr %s136, 4
      %s138 = scalar_lea.vmem %s0, %s137
      %p139 = scmp.lt.s32.totalorder %s13, 1
      %s140 = scalar_select %p139, %s13, 1
      %s141 = smul.addr %s140, 2
      %s142 = smul.addr %s141, 8
      %s143 = scalar_lea.vmem %s2, %s142
      %v144 = vld [vmem:[%s1] sm:$0xff]
      %v145 = vld [vmem:[%s1 + $0x8] sm:$0xff]
      %v146 = vld [vmem:[%s1 + $0x10] sm:$0xff]
      %v147 = vld [vmem:[%s1 + $0x18] sm:$0xff]
      %v148 = vld [vmem:[%s1 + $0x20] sm:$0xff]
      %v149 = vld [vmem:[%s1 + $0x28] sm:$0xff]
      %v150 = vld [vmem:[%s1 + $0x30] sm:$0xff]
      %v151 = vld [vmem:[%s1 + $0x38] sm:$0xff]
      %v152 = vld [vmem:[%s1 + $0x40] sm:$0xff]
      %v153 = vld [vmem:[%s1 + $0x48] sm:$0xff]
      %v154 = vld [vmem:[%s1 + $0x50] sm:$0xff]
      %v155 = vld [vmem:[%s1 + $0x58] sm:$0xff]
      %v156 = vld [vmem:[%s1 + $0x60] sm:$0xff]
      %v157 = vld [vmem:[%s138] sm:$0xff]
      %v159 = vcombine.high %v157, %v157
      %vm160 = vcmask 31744
      %v162 = vsel %vm160, %v144, 0
      %vm164 = vcmask 1043456
      %v165 = vsel %vm164, %v157, 0
      %v167 = vsel %vm164, %v159, 0
      %169 = vmatprep.subr.mxu0 %v167
      %170 = vmatpush1.msra.mxu0 %v165
      %171 = vmatprep.subr.mxu0 0.0
      %172 = vmatpush1.msra.mxu0 0.0
      %173 = vmatprep.subr.mxu0 0.0
      %174 = vmatpush1.msra.mxu0 0.0
      %175 = vmatprep.subr.mxu0 0.0
      %176 = vmatpush1.msra.mxu0 0.0
      %177 = vmatprep.subr.mxu0 0.0
      %178 = vmatpush1.msra.mxu0 0.0
      %179 = vmatprep.subr.mxu0 0.0
      %180 = vmatpush1.msra.mxu0 0.0
      %181 = vmatprep.subr.mxu0 0.0
      %182 = vmatpush1.msra.mxu0 0.0
      %183 = vmatprep.subr.mxu0 0.0
      %184 = vmatpush1.msra.mxu0 0.0
      %185 = vmatprep.subr.mxu0 0.0
      %186 = vmatpush1.msra.mxu0 0.0
      %187 = vmatprep.subr.mxu0 0.0
      %188 = vmatpush1.msra.mxu0 0.0
      %189 = vmatprep.subr.mxu0 0.0
      %190 = vmatpush1.msra.mxu0 0.0
      %191 = vmatprep.subr.mxu0 0.0
      %192 = vmatpush1.msra.mxu0 0.0
      %193 = vmatprep.subr.mxu0 0.0
      %194 = vmatpush1.msra.mxu0 0.0
      %195 = vmatprep.subr.mxu0 0.0
      %196 = vmatpush1.msra.mxu0 0.0
      %197 = vmatprep.subr.mxu0 0.0
      %198 = vmatpush1.msra.mxu0 0.0
      %199 = vmatprep.subr.mxu0 0.0
      %200 = vmatpush1.msra.mxu0 0.0
      %201 = vmatprep.subr.mxu0 0.0
      %202 = vmatpush1.msra.mxu0 0.0
      %203 = vmatprep.subr.mxu0 0.0
      %204 = vmatpush1.msra.mxu0 0.0
      %205 = vmatprep.subr.mxu0 0.0
      %206 = vmatpush1.msra.mxu0 0.0
      %207 = vmatprep.subr.mxu0 0.0
      %208 = vmatpush1.msra.mxu0 0.0
      %209 = vmatprep.subr.mxu0 0.0
      %210 = vmatpush1.msra.mxu0 0.0
      %211 = vmatprep.subr.mxu0 0.0
      %212 = vmatpush1.msra.mxu0 0.0
      %213 = vmatprep.subr.mxu0 0.0
      %214 = vmatpush1.msra.mxu0 0.0
      %215 = vmatprep.subr.mxu0 0.0
      %216 = vmatpush1.msra.mxu0 0.0
      %217 = vmatprep.subr.mxu0 0.0
      %218 = vmatpush1.msra.mxu0 0.0
      %219 = vmatprep.subr.mxu0 0.0
      %220 = vmatpush1.msra.mxu0 0.0
      %221 = vmatprep.subr.mxu0 0.0
      %222 = vmatpush1.msra.mxu0 0.0
      %223 = vmatprep.subr.mxu0 0.0
      %224 = vmatpush1.msra.mxu0 0.0
      %225 = vmatprep.subr.mxu0 0.0
      %226 = vmatpush1.msra.mxu0 0.0
      %227 = vmatprep.subr.mxu0 0.0
      %228 = vmatpush1.msra.mxu0 0.0
      %229 = vmatprep.subr.mxu0 0.0
      %230 = vmatpush1.msra.mxu0 0.0
      %231 = vmatprep.subr.mxu0 0.0
      %232 = vmatpush1.msra.mxu0 0.0
      %233 = vmatprep.mubr.f32.mxu0 0.0
      %234 = vmatmul.mubr.f32.gmra.mrb[0].mxu0 %v162
      %v235 = vpop.f32.mrb[0].mxu0
      %v236 = vadd.f32 0.0, %v235
      %v237 = vpop.f32.mrb[0].mxu0
      %v238 = vadd.f32 0.0, %v237
      %239 = vdwg.mxu0
      %v240 = vmax.f32 %v236, 0.0
      %v241 = vmax.f32 %v238, 0.0
      %243 = vset.pattern.permute.xlu0 0
      %244 = vperm.xlu0 %243, %v146
      %v245 = vpop.permute.xlu0 %244
      %vm247 = vcmask 64512
      %v249 = vsel %vm247, %v145, 0
      %251 = vmatprep.subr.mxu0 %v241
      %252 = vmatpush1.msra.mxu0 %v240
      %253 = vmatprep.subr.mxu0 0.0
      %254 = vmatpush1.msra.mxu0 0.0
      %255 = vmatprep.subr.mxu0 0.0
      %256 = vmatpush1.msra.mxu0 0.0
      %257 = vmatprep.subr.mxu0 0.0
      %258 = vmatpush1.msra.mxu0 0.0
      %259 = vmatprep.subr.mxu0 0.0
      %260 = vmatpush1.msra.mxu0 0.0
      %261 = vmatprep.subr.mxu0 0.0
      %262 = vmatpush1.msra.mxu0 0.0
      %263 = vmatprep.subr.mxu0 0.0
      %264 = vmatpush1.msra.mxu0 0.0
      %265 = vmatprep.subr.mxu0 0.0
      %266 = vmatpush1.msra.mxu0 0.0
      %267 = vmatprep.subr.mxu0 0.0
      %268 = vmatpush1.msra.mxu0 0.0
      %269 = vmatprep.subr.mxu0 0.0
      %270 = vmatpush1.msra.mxu0 0.0
      %271 = vmatprep.subr.mxu0 0.0
      %272 = vmatpush1.msra.mxu0 0.0
      %273 = vmatprep.subr.mxu0 0.0
      %274 = vmatpush1.msra.mxu0 0.0
      %275 = vmatprep.subr.mxu0 0.0
      %276 = vmatpush1.msra.mxu0 0.0
      %277 = vmatprep.subr.mxu0 0.0
      %278 = vmatpush1.msra.mxu0 0.0
      %279 = vmatprep.subr.mxu0 0.0
      %280 = vmatpush1.msra.mxu0 0.0
      %281 = vmatprep.subr.mxu0 0.0
      %282 = vmatpush1.msra.mxu0 0.0
      %283 = vmatprep.subr.mxu0 0.0
      %284 = vmatpush1.msra.mxu0 0.0
      %285 = vmatprep.subr.mxu0 0.0
      %286 = vmatpush1.msra.mxu0 0.0
      %287 = vmatprep.subr.mxu0 0.0
      %288 = vmatpush1.msra.mxu0 0.0
      %289 = vmatprep.subr.mxu0 0.0
      %290 = vmatpush1.msra.mxu0 0.0
      %291 = vmatprep.subr.mxu0 0.0
      %292 = vmatpush1.msra.mxu0 0.0
      %293 = vmatprep.subr.mxu0 0.0
      %294 = vmatpush1.msra.mxu0 0.0
      %295 = vmatprep.subr.mxu0 0.0
      %296 = vmatpush1.msra.mxu0 0.0
      %297 = vmatprep.subr.mxu0 0.0
      %298 = vmatpush1.msra.mxu0 0.0
      %299 = vmatprep.subr.mxu0 0.0
      %300 = vmatpush1.msra.mxu0 0.0
      %301 = vmatprep.subr.mxu0 0.0
      %302 = vmatpush1.msra.mxu0 0.0
      %303 = vmatprep.subr.mxu0 0.0
      %304 = vmatpush1.msra.mxu0 0.0
      %305 = vmatprep.subr.mxu0 0.0
      %306 = vmatpush1.msra.mxu0 0.0
      %307 = vmatprep.subr.mxu0 0.0
      %308 = vmatpush1.msra.mxu0 0.0
      %309 = vmatprep.subr.mxu0 0.0
      %310 = vmatpush1.msra.mxu0 0.0
      %311 = vmatprep.subr.mxu0 0.0
      %312 = vmatpush1.msra.mxu0 0.0
      %313 = vmatprep.subr.mxu0 0.0
      %314 = vmatpush1.msra.mxu0 0.0
      %315 = vmatprep.mubr.f32.mxu0 0.0
      %316 = vmatmul.mubr.f32.gmra.mrb[0].mxu0 %v249
      %v317 = vpop.f32.mrb[0].mxu0
      %v318 = vadd.f32 %v245, %v317
      %v319 = vpop.f32.mrb[0].mxu0
      %v320 = vadd.f32 %v245, %v319
      %321 = vdwg.mxu0
      %v322 = vmax.f32 %v318, 0.0
      %v323 = vmax.f32 %v320, 0.0
      %324 = vxpose.xlu0.b32.start [1/16] %v322, 128
      %325 = vxpose.xlu0.b32.cont [2/16] 0.0, 128
      %326 = vxpose.xlu0.b32.cont [3/16] 0.0, 128
      %327 = vxpose.xlu0.b32.cont [4/16] 0.0, 128
      %328 = vxpose.xlu0.b32.cont [5/16] 0.0, 128
      %329 = vxpose.xlu0.b32.cont [6/16] 0.0, 128
      %330 = vxpose.xlu0.b32.cont [7/16] 0.0, 128
      %331 = vxpose.xlu0.b32.cont [8/16] 0.0, 128
      %332 = vxpose.xlu0.b32.cont [9/16] 0.0, 128
      %333 = vxpose.xlu0.b32.cont [10/16] 0.0, 128
      %334 = vxpose.xlu0.b32.cont [11/16] 0.0, 128
      %335 = vxpose.xlu0.b32.cont [12/16] 0.0, 128
      %336 = vxpose.xlu0.b32.cont [13/16] 0.0, 128
      %337 = vxpose.xlu0.b32.cont [14/16] 0.0, 128
      %338 = vxpose.xlu0.b32.cont [15/16] 0.0, 128
      %339 = vxpose.xlu0.b32.end [16/16] 0.0, 128
      %v340 = vpop.trf.xlu0
      %v341 = vpop.trf.xlu0
      %v342 = vpop.trf.xlu0
      %v343 = vpop.trf.xlu0
      %v344 = vpop.trf.xlu0
      %v345 = vpop.trf.xlu0
      %v346 = vpop.trf.xlu0
      %v347 = vpop.trf.xlu0
      %v348 = vpop.trf.xlu0
      %v349 = vpop.trf.xlu0
      %v350 = vpop.trf.xlu0
      %v351 = vpop.trf.xlu0
      %v352 = vpop.trf.xlu0
      %v353 = vpop.trf.xlu0
      %v354 = vpop.trf.xlu0
      %v355 = vpop.trf.xlu0
      %356 = vxpose.xlu0.b32.start [1/16] %v323, 128
      %357 = vxpose.xlu0.b32.cont [2/16] 0.0, 128
      %358 = vxpose.xlu0.b32.cont [3/16] 0.0, 128
      %359 = vxpose.xlu0.b32.cont [4/16] 0.0, 128
      %360 = vxpose.xlu0.b32.cont [5/16] 0.0, 128
      %361 = vxpose.xlu0.b32.cont [6/16] 0.0, 128
      %362 = vxpose.xlu0.b32.cont [7/16] 0.0, 128
      %363 = vxpose.xlu0.b32.cont [8/16] 0.0, 128
      %364 = vxpose.xlu0.b32.cont [9/16] 0.0, 128
      %365 = vxpose.xlu0.b32.cont [10/16] 0.0, 128
      %366 = vxpose.xlu0.b32.cont [11/16] 0.0, 128
      %367 = vxpose.xlu0.b32.cont [12/16] 0.0, 128
      %368 = vxpose.xlu0.b32.cont [13/16] 0.0, 128
      %369 = vxpose.xlu0.b32.cont [14/16] 0.0, 128
      %370 = vxpose.xlu0.b32.cont [15/16] 0.0, 128
      %371 = vxpose.xlu0.b32.end [16/16] 0.0, 128
      %v372 = vpop.trf.xlu0
      %v373 = vpop.trf.xlu0
      %v374 = vpop.trf.xlu0
      %v375 = vpop.trf.xlu0
      %v376 = vpop.trf.xlu0
      %v377 = vpop.trf.xlu0
      %v378 = vpop.trf.xlu0
      %v379 = vpop.trf.xlu0
      %v380 = vpop.trf.xlu0
      %v381 = vpop.trf.xlu0
      %v382 = vpop.trf.xlu0
      %v383 = vpop.trf.xlu0
      %v384 = vpop.trf.xlu0
      %v385 = vpop.trf.xlu0
      %v386 = vpop.trf.xlu0
      %v387 = vpop.trf.xlu0
      %vm388 = vcmask 130048
      %v390 = vsel %vm388, %v154, 0
      %392 = vmatprep.subr.mxu0 0.0
      %393 = vmatpush1.msra.mxu0 %v340
      %394 = vmatprep.subr.mxu0 0.0
      %395 = vmatpush1.msra.mxu0 %v341
      %396 = vmatprep.subr.mxu0 0.0
      %397 = vmatpush1.msra.mxu0 0.0
      %398 = vmatprep.subr.mxu0 0.0
      %399 = vmatpush1.msra.mxu0 0.0
      %400 = vmatprep.subr.mxu0 0.0
      %401 = vmatpush1.msra.mxu0 0.0
      %402 = vmatprep.subr.mxu0 0.0
      %403 = vmatpush1.msra.mxu0 0.0
      %404 = vmatprep.subr.mxu0 0.0
      %405 = vmatpush1.msra.mxu0 0.0
      %406 = vmatprep.subr.mxu0 0.0
      %407 = vmatpush1.msra.mxu0 0.0
      %408 = vmatprep.subr.mxu0 0.0
      %409 = vmatpush1.msra.mxu0 0.0
      %410 = vmatprep.subr.mxu0 0.0
      %411 = vmatpush1.msra.mxu0 0.0
      %412 = vmatprep.subr.mxu0 0.0
      %413 = vmatpush1.msra.mxu0 0.0
      %414 = vmatprep.subr.mxu0 0.0
      %415 = vmatpush1.msra.mxu0 0.0
      %416 = vmatprep.subr.mxu0 0.0
      %417 = vmatpush1.msra.mxu0 0.0
      %418 = vmatprep.subr.mxu0 0.0
      %419 = vmatpush1.msra.mxu0 0.0
      %420 = vmatprep.subr.mxu0 0.0
      %421 = vmatpush1.msra.mxu0 0.0
      %422 = vmatprep.subr.mxu0 0.0
      %423 = vmatpush1.msra.mxu0 0.0
      %424 = vmatprep.subr.mxu0 0.0
      %425 = vmatpush1.msra.mxu0 0.0
      %426 = vmatprep.subr.mxu0 0.0
      %427 = vmatpush1.msra.mxu0 0.0
      %428 = vmatprep.subr.mxu0 0.0
      %429 = vmatpush1.msra.mxu0 0.0
      %430 = vmatprep.subr.mxu0 0.0
      %431 = vmatpush1.msra.mxu0 0.0
      %432 = vmatprep.subr.mxu0 0.0
      %433 = vmatpush1.msra.mxu0 0.0
      %434 = vmatprep.subr.mxu0 0.0
      %435 = vmatpush1.msra.mxu0 0.0
      %436 = vmatprep.subr.mxu0 0.0
      %437 = vmatpush1.msra.mxu0 0.0
      %438 = vmatprep.subr.mxu0 0.0
      %439 = vmatpush1.msra.mxu0 0.0
      %440 = vmatprep.subr.mxu0 0.0
      %441 = vmatpush1.msra.mxu0 0.0
      %442 = vmatprep.subr.mxu0 0.0
      %443 = vmatpush1.msra.mxu0 0.0
      %444 = vmatprep.subr.mxu0 0.0
      %445 = vmatpush1.msra.mxu0 0.0
      %446 = vmatprep.subr.mxu0 0.0
      %447 = vmatpush1.msra.mxu0 0.0
      %448 = vmatprep.subr.mxu0 0.0
      %449 = vmatpush1.msra.mxu0 0.0
      %450 = vmatprep.subr.mxu0 0.0
      %451 = vmatpush1.msra.mxu0 0.0
      %452 = vmatprep.subr.mxu0 0.0
      %453 = vmatpush1.msra.mxu0 0.0
      %454 = vmatprep.subr.mxu0 0.0
      %455 = vmatpush1.msra.mxu0 0.0
      %456 = vmatprep.mubr.f32.mxu0 0.0
      %457 = vmatmul.mubr.f32.gmra.mrb[0].mxu0 %v390
      %v458 = vpop.f32.mrb[0].mxu0
      %v459 = vadd.f32 0.0, %v458
      %v460 = vpop.f32.mrb[0].mxu0
      %461 = vdwg.mxu0
      %462 = vmatprep.subr.mxu0 0.0
      %463 = vmatpush1.msra.mxu0 %v344
      %464 = vmatprep.subr.mxu0 0.0
      %465 = vmatpush1.msra.mxu0 %v345
      %466 = vmatprep.subr.mxu0 0.0
      %467 = vmatpush1.msra.mxu0 0.0
      %468 = vmatprep.subr.mxu0 0.0
      %469 = vmatpush1.msra.mxu0 0.0
      %470 = vmatprep.subr.mxu0 0.0
      %471 = vmatpush1.msra.mxu0 0.0
      %472 = vmatprep.subr.mxu0 0.0
      %473 = vmatpush1.msra.mxu0 0.0
      %474 = vmatprep.subr.mxu0 0.0
      %475 = vmatpush1.msra.mxu0 0.0
      %476 = vmatprep.subr.mxu0 0.0
      %477 = vmatpush1.msra.mxu0 0.0
      %478 = vmatprep.subr.mxu0 0.0
      %479 = vmatpush1.msra.mxu0 0.0
      %480 = vmatprep.subr.mxu0 0.0
      %481 = vmatpush1.msra.mxu0 0.0
      %482 = vmatprep.subr.mxu0 0.0
      %483 = vmatpush1.msra.mxu0 0.0
      %484 = vmatprep.subr.mxu0 0.0
      %485 = vmatpush1.msra.mxu0 0.0
      %486 = vmatprep.subr.mxu0 0.0
      %487 = vmatpush1.msra.mxu0 0.0
      %488 = vmatprep.subr.mxu0 0.0
      %489 = vmatpush1.msra.mxu0 0.0
      %490 = vmatprep.subr.mxu0 0.0
      %491 = vmatpush1.msra.mxu0 0.0
      %492 = vmatprep.subr.mxu0 0.0
      %493 = vmatpush1.msra.mxu0 0.0
      %494 = vmatprep.subr.mxu0 0.0
      %495 = vmatpush1.msra.mxu0 0.0
      %496 = vmatprep.subr.mxu0 0.0
      %497 = vmatpush1.msra.mxu0 0.0
      %498 = vmatprep.subr.mxu0 0.0
      %499 = vmatpush1.msra.mxu0 0.0
      %500 = vmatprep.subr.mxu0 0.0
      %501 = vmatpush1.msra.mxu0 0.0
      %502 = vmatprep.subr.mxu0 0.0
      %503 = vmatpush1.msra.mxu0 0.0
      %504 = vmatprep.subr.mxu0 0.0
      %505 = vmatpush1.msra.mxu0 0.0
      %506 = vmatprep.subr.mxu0 0.0
      %507 = vmatpush1.msra.mxu0 0.0
      %508 = vmatprep.subr.mxu0 0.0
      %509 = vmatpush1.msra.mxu0 0.0
      %510 = vmatprep.subr.mxu0 0.0
      %511 = vmatpush1.msra.mxu0 0.0
      %512 = vmatprep.subr.mxu0 0.0
      %513 = vmatpush1.msra.mxu0 0.0
      %514 = vmatprep.subr.mxu0 0.0
      %515 = vmatpush1.msra.mxu0 0.0
      %516 = vmatprep.subr.mxu0 0.0
      %517 = vmatpush1.msra.mxu0 0.0
      %518 = vmatprep.subr.mxu0 0.0
      %519 = vmatpush1.msra.mxu0 0.0
      %520 = vmatprep.subr.mxu0 0.0
      %521 = vmatpush1.msra.mxu0 0.0
      %522 = vmatprep.subr.mxu0 0.0
      %523 = vmatpush1.msra.mxu0 0.0
      %524 = vmatprep.subr.mxu0 0.0
      %525 = vmatpush1.msra.mxu0 0.0
      %526 = vmatprep.mubr.f32.mxu0 0.0
      %527 = vmatmul.mubr.f32.gmra.mrb[0].mxu0 %v390
      %v528 = vpop.f32.mrb[0].mxu0
      %v529 = vadd.f32 0.0, %v528
      %v530 = vpop.f32.mrb[0].mxu0
      %531 = vdwg.mxu0
      %532 = vmatprep.subr.mxu0 0.0
      %533 = vmatpush1.msra.mxu0 %v348
      %534 = vmatprep.subr.mxu0 0.0
      %535 = vmatpush1.msra.mxu0 %v349
      %536 = vmatprep.subr.mxu0 0.0
      %537 = vmatpush1.msra.mxu0 0.0
      %538 = vmatprep.subr.mxu0 0.0
      %539 = vmatpush1.msra.mxu0 0.0
      %540 = vmatprep.subr.mxu0 0.0
      %541 = vmatpush1.msra.mxu0 0.0
      %542 = vmatprep.subr.mxu0 0.0
      %543 = vmatpush1.msra.mxu0 0.0
      %544 = vmatprep.subr.mxu0 0.0
      %545 = vmatpush1.msra.mxu0 0.0
      %546 = vmatprep.subr.mxu0 0.0
      %547 = vmatpush1.msra.mxu0 0.0
      %548 = vmatprep.subr.mxu0 0.0
      %549 = vmatpush1.msra.mxu0 0.0
      %550 = vmatprep.subr.mxu0 0.0
      %551 = vmatpush1.msra.mxu0 0.0
      %552 = vmatprep.subr.mxu0 0.0
      %553 = vmatpush1.msra.mxu0 0.0
      %554 = vmatprep.subr.mxu0 0.0
      %555 = vmatpush1.msra.mxu0 0.0
      %556 = vmatprep.subr.mxu0 0.0
      %557 = vmatpush1.msra.mxu0 0.0
      %558 = vmatprep.subr.mxu0 0.0
      %559 = vmatpush1.msra.mxu0 0.0
      %560 = vmatprep.subr.mxu0 0.0
      %561 = vmatpush1.msra.mxu0 0.0
      %562 = vmatprep.subr.mxu0 0.0
      %563 = vmatpush1.msra.mxu0 0.0
      %564 = vmatprep.subr.mxu0 0.0
      %565 = vmatpush1.msra.mxu0 0.0
      %566 = vmatprep.subr.mxu0 0.0
      %567 = vmatpush1.msra.mxu0 0.0
      %568 = vmatprep.subr.mxu0 0.0
      %569 = vmatpush1.msra.mxu0 0.0
      %570 = vmatprep.subr.mxu0 0.0
      %571 = vmatpush1.msra.mxu0 0.0
      %572 = vmatprep.subr.mxu0 0.0
      %573 = vmatpush1.msra.mxu0 0.0
      %574 = vmatprep.subr.mxu0 0.0
      %575 = vmatpush1.msra.mxu0 0.0
      %576 = vmatprep.subr.mxu0 0.0
      %577 = vmatpush1.msra.mxu0 0.0
      %578 = vmatprep.subr.mxu0 0.0
      %579 = vmatpush1.msra.mxu0 0.0
      %580 = vmatprep.subr.mxu0 0.0
      %581 = vmatpush1.msra.mxu0 0.0
      %582 = vmatprep.subr.mxu0 0.0
      %583 = vmatpush1.msra.mxu0 0.0
      %584 = vmatprep.subr.mxu0 0.0
      %585 = vmatpush1.msra.mxu0 0.0
      %586 = vmatprep.subr.mxu0 0.0
      %587 = vmatpush1.msra.mxu0 0.0
      %588 = vmatprep.subr.mxu0 0.0
      %589 = vmatpush1.msra.mxu0 0.0
      %590 = vmatprep.subr.mxu0 0.0
      %591 = vmatpush1.msra.mxu0 0.0
      %592 = vmatprep.subr.mxu0 0.0
      %593 = vmatpush1.msra.mxu0 0.0
      %594 = vmatprep.subr.mxu0 0.0
      %595 = vmatpush1.msra.mxu0 0.0
      %596 = vmatprep.mubr.f32.mxu0 0.0
      %597 = vmatmul.mubr.f32.gmra.mrb[0].mxu0 %v390
      %v598 = vpop.f32.mrb[0].mxu0
      %v599 = vadd.f32 0.0, %v598
      %v600 = vpop.f32.mrb[0].mxu0
      %601 = vdwg.mxu0
      %602 = vmatprep.subr.mxu0 0.0
      %603 = vmatpush1.msra.mxu0 %v352
      %604 = vmatprep.subr.mxu0 0.0
      %605 = vmatpush1.msra.mxu0 %v353
      %606 = vmatprep.subr.mxu0 0.0
      %607 = vmatpush1.msra.mxu0 0.0
      %608 = vmatprep.subr.mxu0 0.0
      %609 = vmatpush1.msra.mxu0 0.0
      %610 = vmatprep.subr.mxu0 0.0
      %611 = vmatpush1.msra.mxu0 0.0
      %612 = vmatprep.subr.mxu0 0.0
      %613 = vmatpush1.msra.mxu0 0.0
      %614 = vmatprep.subr.mxu0 0.0
      %615 = vmatpush1.msra.mxu0 0.0
      %616 = vmatprep.subr.mxu0 0.0
      %617 = vmatpush1.msra.mxu0 0.0
      %618 = vmatprep.subr.mxu0 0.0
      %619 = vmatpush1.msra.mxu0 0.0
      %620 = vmatprep.subr.mxu0 0.0
      %621 = vmatpush1.msra.mxu0 0.0
      %622 = vmatprep.subr.mxu0 0.0
      %623 = vmatpush1.msra.mxu0 0.0
      %624 = vmatprep.subr.mxu0 0.0
      %625 = vmatpush1.msra.mxu0 0.0
      %626 = vmatprep.subr.mxu0 0.0
      %627 = vmatpush1.msra.mxu0 0.0
      %628 = vmatprep.subr.mxu0 0.0
      %629 = vmatpush1.msra.mxu0 0.0
      %630 = vmatprep.subr.mxu0 0.0
      %631 = vmatpush1.msra.mxu0 0.0
      %632 = vmatprep.subr.mxu0 0.0
      %633 = vmatpush1.msra.mxu0 0.0
      %634 = vmatprep.subr.mxu0 0.0
      %635 = vmatpush1.msra.mxu0 0.0
      %636 = vmatprep.subr.mxu0 0.0
      %637 = vmatpush1.msra.mxu0 0.0
      %638 = vmatprep.subr.mxu0 0.0
      %639 = vmatpush1.msra.mxu0 0.0
      %640 = vmatprep.subr.mxu0 0.0
      %641 = vmatpush1.msra.mxu0 0.0
      %642 = vmatprep.subr.mxu0 0.0
      %643 = vmatpush1.msra.mxu0 0.0
      %644 = vmatprep.subr.mxu0 0.0
      %645 = vmatpush1.msra.mxu0 0.0
      %646 = vmatprep.subr.mxu0 0.0
      %647 = vmatpush1.msra.mxu0 0.0
      %648 = vmatprep.subr.mxu0 0.0
      %649 = vmatpush1.msra.mxu0 0.0
      %650 = vmatprep.subr.mxu0 0.0
      %651 = vmatpush1.msra.mxu0 0.0
      %652 = vmatprep.subr.mxu0 0.0
      %653 = vmatpush1.msra.mxu0 0.0
      %654 = vmatprep.subr.mxu0 0.0
      %655 = vmatpush1.msra.mxu0 0.0
      %656 = vmatprep.subr.mxu0 0.0
      %657 = vmatpush1.msra.mxu0 0.0
      %658 = vmatprep.subr.mxu0 0.0
      %659 = vmatpush1.msra.mxu0 0.0
      %660 = vmatprep.subr.mxu0 0.0
      %661 = vmatpush1.msra.mxu0 0.0
      %662 = vmatprep.subr.mxu0 0.0
      %663 = vmatpush1.msra.mxu0 0.0
      %664 = vmatprep.subr.mxu0 0.0
      %665 = vmatpush1.msra.mxu0 0.0
      %666 = vmatprep.mubr.f32.mxu0 0.0
      %667 = vmatmul.mubr.f32.gmra.mrb[0].mxu0 %v390
      %v668 = vpop.f32.mrb[0].mxu0
      %v669 = vadd.f32 0.0, %v668
      %v670 = vpop.f32.mrb[0].mxu0
      %671 = vdwg.mxu0
      %672 = vmatprep.subr.mxu0 0.0
      %673 = vmatpush1.msra.mxu0 %v372
      %674 = vmatprep.subr.mxu0 0.0
      %675 = vmatpush1.msra.mxu0 %v373
      %676 = vmatprep.subr.mxu0 0.0
      %677 = vmatpush1.msra.mxu0 0.0
      %678 = vmatprep.subr.mxu0 0.0
      %679 = vmatpush1.msra.mxu0 0.0
      %680 = vmatprep.subr.mxu0 0.0
      %681 = vmatpush1.msra.mxu0 0.0
      %682 = vmatprep.subr.mxu0 0.0
      %683 = vmatpush1.msra.mxu0 0.0
      %684 = vmatprep.subr.mxu0 0.0
      %685 = vmatpush1.msra.mxu0 0.0
      %686 = vmatprep.subr.mxu0 0.0
      %687 = vmatpush1.msra.mxu0 0.0
      %688 = vmatprep.subr.mxu0 0.0
      %689 = vmatpush1.msra.mxu0 0.0
      %690 = vmatprep.subr.mxu0 0.0
      %691 = vmatpush1.msra.mxu0 0.0
      %692 = vmatprep.subr.mxu0 0.0
      %693 = vmatpush1.msra.mxu0 0.0
      %694 = vmatprep.subr.mxu0 0.0
      %695 = vmatpush1.msra.mxu0 0.0
      %696 = vmatprep.subr.mxu0 0.0
      %697 = vmatpush1.msra.mxu0 0.0
      %698 = vmatprep.subr.mxu0 0.0
      %699 = vmatpush1.msra.mxu0 0.0
      %700 = vmatprep.subr.mxu0 0.0
      %701 = vmatpush1.msra.mxu0 0.0
      %702 = vmatprep.subr.mxu0 0.0
      %703 = vmatpush1.msra.mxu0 0.0
      %704 = vmatprep.subr.mxu0 0.0
      %705 = vmatpush1.msra.mxu0 0.0
      %706 = vmatprep.subr.mxu0 0.0
      %707 = vmatpush1.msra.mxu0 0.0
      %708 = vmatprep.subr.mxu0 0.0
      %709 = vmatpush1.msra.mxu0 0.0
      %710 = vmatprep.subr.mxu0 0.0
      %711 = vmatpush1.msra.mxu0 0.0
      %712 = vmatprep.subr.mxu0 0.0
      %713 = vmatpush1.msra.mxu0 0.0
      %714 = vmatprep.subr.mxu0 0.0
      %715 = vmatpush1.msra.mxu0 0.0
      %716 = vmatprep.subr.mxu0 0.0
      %717 = vmatpush1.msra.mxu0 0.0
      %718 = vmatprep.subr.mxu0 0.0
      %719 = vmatpush1.msra.mxu0 0.0
      %720 = vmatprep.subr.mxu0 0.0
      %721 = vmatpush1.msra.mxu0 0.0
      %722 = vmatprep.subr.mxu0 0.0
      %723 = vmatpush1.msra.mxu0 0.0
      %724 = vmatprep.subr.mxu0 0.0
      %725 = vmatpush1.msra.mxu0 0.0
      %726 = vmatprep.subr.mxu0 0.0
      %727 = vmatpush1.msra.mxu0 0.0
      %728 = vmatprep.subr.mxu0 0.0
      %729 = vmatpush1.msra.mxu0 0.0
      %730 = vmatprep.subr.mxu0 0.0
      %731 = vmatpush1.msra.mxu0 0.0
      %732 = vmatprep.subr.mxu0 0.0
      %733 = vmatpush1.msra.mxu0 0.0
      %734 = vmatprep.subr.mxu0 0.0
      %735 = vmatpush1.msra.mxu0 0.0
      %736 = vmatprep.mubr.f32.mxu0 0.0
      %737 = vmatmul.mubr.f32.gmra.mrb[0].mxu0 %v390
      %v738 = vpop.f32.mrb[0].mxu0
      %v739 = vadd.f32 0.0, %v738
      %v740 = vpop.f32.mrb[0].mxu0
      %741 = vdwg.mxu0
      %742 = vmatprep.subr.mxu0 0.0
      %743 = vmatpush1.msra.mxu0 %v376
      %744 = vmatprep.subr.mxu0 0.0
      %745 = vmatpush1.msra.mxu0 %v377
      %746 = vmatprep.subr.mxu0 0.0
      %747 = vmatpush1.msra.mxu0 0.0
      %748 = vmatprep.subr.mxu0 0.0
      %749 = vmatpush1.msra.mxu0 0.0
      %750 = vmatprep.subr.mxu0 0.0
      %751 = vmatpush1.msra.mxu0 0.0
      %752 = vmatprep.subr.mxu0 0.0
      %753 = vmatpush1.msra.mxu0 0.0
      %754 = vmatprep.subr.mxu0 0.0
      %755 = vmatpush1.msra.mxu0 0.0
      %756 = vmatprep.subr.mxu0 0.0
      %757 = vmatpush1.msra.mxu0 0.0
      %758 = vmatprep.subr.mxu0 0.0
      %759 = vmatpush1.msra.mxu0 0.0
      %760 = vmatprep.subr.mxu0 0.0
      %761 = vmatpush1.msra.mxu0 0.0
      %762 = vmatprep.subr.mxu0 0.0
      %763 = vmatpush1.msra.mxu0 0.0
      %764 = vmatprep.subr.mxu0 0.0
      %765 = vmatpush1.msra.mxu0 0.0
      %766 = vmatprep.subr.mxu0 0.0
      %767 = vmatpush1.msra.mxu0 0.0
      %768 = vmatprep.subr.mxu0 0.0
      %769 = vmatpush1.msra.mxu0 0.0
      %770 = vmatprep.subr.mxu0 0.0
      %771 = vmatpush1.msra.mxu0 0.0
      %772 = vmatprep.subr.mxu0 0.0
      %773 = vmatpush1.msra.mxu0 0.0
      %774 = vmatprep.subr.mxu0 0.0
      %775 = vmatpush1.msra.mxu0 0.0
      %776 = vmatprep.subr.mxu0 0.0
      %777 = vmatpush1.msra.mxu0 0.0
      %778 = vmatprep.subr.mxu0 0.0
      %779 = vmatpush1.msra.mxu0 0.0
      %780 = vmatprep.subr.mxu0 0.0
      %781 = vmatpush1.msra.mxu0 0.0
      %782 = vmatprep.subr.mxu0 0.0
      %783 = vmatpush1.msra.mxu0 0.0
      %784 = vmatprep.subr.mxu0 0.0
      %785 = vmatpush1.msra.mxu0 0.0
      %786 = vmatprep.subr.mxu0 0.0
      %787 = vmatpush1.msra.mxu0 0.0
      %788 = vmatprep.subr.mxu0 0.0
      %789 = vmatpush1.msra.mxu0 0.0
      %790 = vmatprep.subr.mxu0 0.0
      %791 = vmatpush1.msra.mxu0 0.0
      %792 = vmatprep.subr.mxu0 0.0
      %793 = vmatpush1.msra.mxu0 0.0
      %794 = vmatprep.subr.mxu0 0.0
      %795 = vmatpush1.msra.mxu0 0.0
      %796 = vmatprep.subr.mxu0 0.0
      %797 = vmatpush1.msra.mxu0 0.0
      %798 = vmatprep.subr.mxu0 0.0
      %799 = vmatpush1.msra.mxu0 0.0
      %800 = vmatprep.subr.mxu0 0.0
      %801 = vmatpush1.msra.mxu0 0.0
      %802 = vmatprep.subr.mxu0 0.0
      %803 = vmatpush1.msra.mxu0 0.0
      %804 = vmatprep.subr.mxu0 0.0
      %805 = vmatpush1.msra.mxu0 0.0
      %806 = vmatprep.mubr.f32.mxu0 0.0
      %807 = vmatmul.mubr.f32.gmra.mrb[0].mxu0 %v390
      %v808 = vpop.f32.mrb[0].mxu0
      %v809 = vadd.f32 0.0, %v808
      %v810 = vpop.f32.mrb[0].mxu0
      %811 = vdwg.mxu0
      %812 = vmatprep.subr.mxu0 0.0
      %813 = vmatpush1.msra.mxu0 %v380
      %814 = vmatprep.subr.mxu0 0.0
      %815 = vmatpush1.msra.mxu0 %v381
      %816 = vmatprep.subr.mxu0 0.0
      %817 = vmatpush1.msra.mxu0 0.0
      %818 = vmatprep.subr.mxu0 0.0
      %819 = vmatpush1.msra.mxu0 0.0
      %820 = vmatprep.subr.mxu0 0.0
      %821 = vmatpush1.msra.mxu0 0.0
      %822 = vmatprep.subr.mxu0 0.0
      %823 = vmatpush1.msra.mxu0 0.0
      %824 = vmatprep.subr.mxu0 0.0
      %825 = vmatpush1.msra.mxu0 0.0
      %826 = vmatprep.subr.mxu0 0.0
      %827 = vmatpush1.msra.mxu0 0.0
      %828 = vmatprep.subr.mxu0 0.0
      %829 = vmatpush1.msra.mxu0 0.0
      %830 = vmatprep.subr.mxu0 0.0
      %831 = vmatpush1.msra.mxu0 0.0
      %832 = vmatprep.subr.mxu0 0.0
      %833 = vmatpush1.msra.mxu0 0.0
      %834 = vmatprep.subr.mxu0 0.0
      %835 = vmatpush1.msra.mxu0 0.0
      %836 = vmatprep.subr.mxu0 0.0
      %837 = vmatpush1.msra.mxu0 0.0
      %838 = vmatprep.subr.mxu0 0.0
      %839 = vmatpush1.msra.mxu0 0.0
      %840 = vmatprep.subr.mxu0 0.0
      %841 = vmatpush1.msra.mxu0 0.0
      %842 = vmatprep.subr.mxu0 0.0
      %843 = vmatpush1.msra.mxu0 0.0
      %844 = vmatprep.subr.mxu0 0.0
      %845 = vmatpush1.msra.mxu0 0.0
      %846 = vmatprep.subr.mxu0 0.0
      %847 = vmatpush1.msra.mxu0 0.0
      %848 = vmatprep.subr.mxu0 0.0
      %849 = vmatpush1.msra.mxu0 0.0
      %850 = vmatprep.subr.mxu0 0.0
      %851 = vmatpush1.msra.mxu0 0.0
      %852 = vmatprep.subr.mxu0 0.0
      %853 = vmatpush1.msra.mxu0 0.0
      %854 = vmatprep.subr.mxu0 0.0
      %855 = vmatpush1.msra.mxu0 0.0
      %856 = vmatprep.subr.mxu0 0.0
      %857 = vmatpush1.msra.mxu0 0.0
      %858 = vmatprep.subr.mxu0 0.0
      %859 = vmatpush1.msra.mxu0 0.0
      %860 = vmatprep.subr.mxu0 0.0
      %861 = vmatpush1.msra.mxu0 0.0
      %862 = vmatprep.subr.mxu0 0.0
      %863 = vmatpush1.msra.mxu0 0.0
      %864 = vmatprep.subr.mxu0 0.0
      %865 = vmatpush1.msra.mxu0 0.0
      %866 = vmatprep.subr.mxu0 0.0
      %867 = vmatpush1.msra.mxu0 0.0
      %868 = vmatprep.subr.mxu0 0.0
      %869 = vmatpush1.msra.mxu0 0.0
      %870 = vmatprep.subr.mxu0 0.0
      %871 = vmatpush1.msra.mxu0 0.0
      %872 = vmatprep.subr.mxu0 0.0
      %873 = vmatpush1.msra.mxu0 0.0
      %874 = vmatprep.subr.mxu0 0.0
      %875 = vmatpush1.msra.mxu0 0.0
      %876 = vmatprep.mubr.f32.mxu0 0.0
      %877 = vmatmul.mubr.f32.gmra.mrb[0].mxu0 %v390
      %v878 = vpop.f32.mrb[0].mxu0
      %v879 = vadd.f32 0.0, %v878
      %v880 = vpop.f32.mrb[0].mxu0
      %881 = vdwg.mxu0
      %882 = vmatprep.subr.mxu0 0.0
      %883 = vmatpush1.msra.mxu0 %v384
      %884 = vmatprep.subr.mxu0 0.0
      %885 = vmatpush1.msra.mxu0 %v385
      %886 = vmatprep.subr.mxu0 0.0
      %887 = vmatpush1.msra.mxu0 0.0
      %888 = vmatprep.subr.mxu0 0.0
      %889 = vmatpush1.msra.mxu0 0.0
      %890 = vmatprep.subr.mxu0 0.0
      %891 = vmatpush1.msra.mxu0 0.0
      %892 = vmatprep.subr.mxu0 0.0
      %893 = vmatpush1.msra.mxu0 0.0
      %894 = vmatprep.subr.mxu0 0.0
      %895 = vmatpush1.msra.mxu0 0.0
      %896 = vmatprep.subr.mxu0 0.0
      %897 = vmatpush1.msra.mxu0 0.0
      %898 = vmatprep.subr.mxu0 0.0
      %899 = vmatpush1.msra.mxu0 0.0
      %900 = vmatprep.subr.mxu0 0.0
      %901 = vmatpush1.msra.mxu0 0.0
      %902 = vmatprep.subr.mxu0 0.0
      %903 = vmatpush1.msra.mxu0 0.0
      %904 = vmatprep.subr.mxu0 0.0
      %905 = vmatpush1.msra.mxu0 0.0
      %906 = vmatprep.subr.mxu0 0.0
      %907 = vmatpush1.msra.mxu0 0.0
      %908 = vmatprep.subr.mxu0 0.0
      %909 = vmatpush1.msra.mxu0 0.0
      %910 = vmatprep.subr.mxu0 0.0
      %911 = vmatpush1.msra.mxu0 0.0
      %912 = vmatprep.subr.mxu0 0.0
      %913 = vmatpush1.msra.mxu0 0.0
      %914 = vmatprep.subr.mxu0 0.0
      %915 = vmatpush1.msra.mxu0 0.0
      %916 = vmatprep.subr.mxu0 0.0
      %917 = vmatpush1.msra.mxu0 0.0
      %918 = vmatprep.subr.mxu0 0.0
      %919 = vmatpush1.msra.mxu0 0.0
      %920 = vmatprep.subr.mxu0 0.0
      %921 = vmatpush1.msra.mxu0 0.0
      %922 = vmatprep.subr.mxu0 0.0
      %923 = vmatpush1.msra.mxu0 0.0
      %924 = vmatprep.subr.mxu0 0.0
      %925 = vmatpush1.msra.mxu0 0.0
      %926 = vmatprep.subr.mxu0 0.0
      %927 = vmatpush1.msra.mxu0 0.0
      %928 = vmatprep.subr.mxu0 0.0
      %929 = vmatpush1.msra.mxu0 0.0
      %930 = vmatprep.subr.mxu0 0.0
      %931 = vmatpush1.msra.mxu0 0.0
      %932 = vmatprep.subr.mxu0 0.0
      %933 = vmatpush1.msra.mxu0 0.0
      %934 = vmatprep.subr.mxu0 0.0
      %935 = vmatpush1.msra.mxu0 0.0
      %936 = vmatprep.subr.mxu0 0.0
      %937 = vmatpush1.msra.mxu0 0.0
      %938 = vmatprep.subr.mxu0 0.0
      %939 = vmatpush1.msra.mxu0 0.0
      %940 = vmatprep.subr.mxu0 0.0
      %941 = vmatpush1.msra.mxu0 0.0
      %942 = vmatprep.subr.mxu0 0.0
      %943 = vmatpush1.msra.mxu0 0.0
      %944 = vmatprep.subr.mxu0 0.0
      %945 = vmatpush1.msra.mxu0 0.0
      %946 = vmatprep.mubr.f32.mxu0 0.0
      %947 = vmatmul.mubr.f32.gmra.mrb[0].mxu0 %v390
      %v948 = vpop.f32.mrb[0].mxu0
      %v949 = vadd.f32 0.0, %v948
      %v950 = vpop.f32.mrb[0].mxu0
      %951 = vdwg.mxu0
      %v953 = vsel %vm247, %v147, 0
      %v956 = vsel %vm247, %v148, 0
      %v959 = vsel %vm247, %v459, 0
      %v962 = vsel %vm247, %v529, 0
      %v965 = vsel %vm247, %v599, 0
      %v968 = vsel %vm247, %v669, 0
      %v971 = vsel %vm247, %v739, 0
      %v974 = vsel %vm247, %v809, 0
      %v977 = vsel %vm247, %v879, 0
      %v980 = vsel %vm247, %v949, 0
      %982 = vmatprep.subr.mxu0 0.0
      %983 = vmatpush1.xpose.msra.mxu0 %v959
      %984 = vmatprep.subr.mxu0 0.0
      %985 = vmatpush1.xpose.msra.mxu0 %v962
      %986 = vmatprep.subr.mxu0 0.0
      %987 = vmatpush1.xpose.msra.mxu0 %v965
      %988 = vmatprep.subr.mxu0 0.0
      %989 = vmatpush1.xpose.msra.mxu0 %v968
      %990 = vmatprep.subr.mxu0 0.0
      %991 = vmatpush1.xpose.msra.mxu0 %v971
      %992 = vmatprep.subr.mxu0 0.0
      %993 = vmatpush1.xpose.msra.mxu0 %v974
      %994 = vmatprep.subr.mxu0 0.0
      %995 = vmatpush1.xpose.msra.mxu0 %v977
      %996 = vmatprep.subr.mxu0 0.0
      %997 = vmatpush1.xpose.msra.mxu0 %v980
      %998 = vmatprep.subr.mxu0 0.0
      %999 = vmatpush1.xpose.msra.mxu0 0.0
      %1000 = vmatprep.subr.mxu0 0.0
      %1001 = vmatpush1.xpose.msra.mxu0 0.0
      %1002 = vmatprep.subr.mxu0 0.0
      %1003 = vmatpush1.xpose.msra.mxu0 0.0
      %1004 = vmatprep.subr.mxu0 0.0
      %1005 = vmatpush1.xpose.msra.mxu0 0.0
      %1006 = vmatprep.subr.mxu0 0.0
      %1007 = vmatpush1.xpose.msra.mxu0 0.0
      %1008 = vmatprep.subr.mxu0 0.0
      %1009 = vmatpush1.xpose.msra.mxu0 0.0
      %1010 = vmatprep.subr.mxu0 0.0
      %1011 = vmatpush1.xpose.msra.mxu0 0.0
      %1012 = vmatprep.subr.mxu0 0.0
      %1013 = vmatpush1.xpose.msra.mxu0 0.0
      %1014 = vmatprep.subr.mxu0 0.0
      %1015 = vmatpush1.xpose.msra.mxu0 0.0
      %1016 = vmatprep.subr.mxu0 0.0
      %1017 = vmatpush1.xpose.msra.mxu0 0.0
      %1018 = vmatprep.subr.mxu0 0.0
      %1019 = vmatpush1.xpose.msra.mxu0 0.0
      %1020 = vmatprep.subr.mxu0 0.0
      %1021 = vmatpush1.xpose.msra.mxu0 0.0
      %1022 = vmatprep.subr.mxu0 0.0
      %1023 = vmatpush1.xpose.msra.mxu0 0.0
      %1024 = vmatprep.subr.mxu0 0.0
      %1025 = vmatpush1.xpose.msra.mxu0 0.0
      %1026 = vmatprep.subr.mxu0 0.0
      %1027 = vmatpush1.xpose.msra.mxu0 0.0
      %1028 = vmatprep.subr.mxu0 0.0
      %1029 = vmatpush1.xpose.msra.mxu0 0.0
      %1030 = vmatprep.subr.mxu0 0.0
      %1031 = vmatpush1.xpose.msra.mxu0 0.0
      %1032 = vmatprep.subr.mxu0 0.0
      %1033 = vmatpush1.xpose.msra.mxu0 0.0
      %1034 = vmatprep.subr.mxu0 0.0
      %1035 = vmatpush1.xpose.msra.mxu0 0.0
      %1036 = vmatprep.subr.mxu0 0.0
      %1037 = vmatpush1.xpose.msra.mxu0 0.0
      %1038 = vmatprep.subr.mxu0 0.0
      %1039 = vmatpush1.xpose.msra.mxu0 0.0
      %1040 = vmatprep.subr.mxu0 0.0
      %1041 = vmatpush1.xpose.msra.mxu0 0.0
      %1042 = vmatprep.subr.mxu0 0.0
      %1043 = vmatpush1.xpose.msra.mxu0 0.0
      %1044 = vmatprep.subr.mxu0 0.0
      %1045 = vmatpush1.xpose.msra.mxu0 0.0
      %1046 = vmatprep.mubr.f32.mxu0 0.0
      %1047 = vmatmul.mubr.f32.gmra.mrb[0].mxu0 %v953
      %v1048 = vpop.f32.mrb[0].mxu0
      %v1049 = vadd.f32 0.0, %v1048
      %v1050 = vpop.f32.mrb[0].mxu0
      %1051 = vmatprep.mubr.f32.mxu0 0.0
      %1052 = vmatmul.mubr.f32.gmra.mrb[0].mxu0 %v956
      %v1053 = vpop.f32.mrb[0].mxu0
      %v1054 = vadd.f32 0.0, %v1053
      %v1055 = vpop.f32.mrb[0].mxu0
      %1056 = vdwg.mxu0
      %v1057 = vmax.f32 %v1049, 0.0
      %v1058 = vmax.f32 %v1054, 0.0
      %1060 = vset.pattern.permute.xlu0 0
      %1061 = vperm.xlu0 %1060, %v151
      %v1062 = vpop.permute.xlu0 %1061
      %1065 = vset.pattern.permute.xlu0 0
      %1066 = vperm.xlu0 %1065, %v152
      %v1067 = vpop.permute.xlu0 %1066
      %v1070 = vsel %vm388, %v149, 0
      %v1073 = vsel %vm388, %v150, 0
      %1075 = vmatprep.subr.mxu0 0.0
      %1076 = vmatpush1.msra.mxu0 %v1057
      %1077 = vmatprep.subr.mxu0 0.0
      %1078 = vmatpush1.msra.mxu0 %v1058
      %1079 = vmatprep.subr.mxu0 0.0
      %1080 = vmatpush1.msra.mxu0 0.0
      %1081 = vmatprep.subr.mxu0 0.0
      %1082 = vmatpush1.msra.mxu0 0.0
      %1083 = vmatprep.subr.mxu0 0.0
      %1084 = vmatpush1.msra.mxu0 0.0
      %1085 = vmatprep.subr.mxu0 0.0
      %1086 = vmatpush1.msra.mxu0 0.0
      %1087 = vmatprep.subr.mxu0 0.0
      %1088 = vmatpush1.msra.mxu0 0.0
      %1089 = vmatprep.subr.mxu0 0.0
      %1090 = vmatpush1.msra.mxu0 0.0
      %1091 = vmatprep.subr.mxu0 0.0
      %1092 = vmatpush1.msra.mxu0 0.0
      %1093 = vmatprep.subr.mxu0 0.0
      %1094 = vmatpush1.msra.mxu0 0.0
      %1095 = vmatprep.subr.mxu0 0.0
      %1096 = vmatpush1.msra.mxu0 0.0
      %1097 = vmatprep.subr.mxu0 0.0
      %1098 = vmatpush1.msra.mxu0 0.0
      %1099 = vmatprep.subr.mxu0 0.0
      %1100 = vmatpush1.msra.mxu0 0.0
      %1101 = vmatprep.subr.mxu0 0.0
      %1102 = vmatpush1.msra.mxu0 0.0
      %1103 = vmatprep.subr.mxu0 0.0
      %1104 = vmatpush1.msra.mxu0 0.0
      %1105 = vmatprep.subr.mxu0 0.0
      %1106 = vmatpush1.msra.mxu0 0.0
      %1107 = vmatprep.subr.mxu0 0.0
      %1108 = vmatpush1.msra.mxu0 0.0
      %1109 = vmatprep.subr.mxu0 0.0
      %1110 = vmatpush1.msra.mxu0 0.0
      %1111 = vmatprep.subr.mxu0 0.0
      %1112 = vmatpush1.msra.mxu0 0.0
      %1113 = vmatprep.subr.mxu0 0.0
      %1114 = vmatpush1.msra.mxu0 0.0
      %1115 = vmatprep.subr.mxu0 0.0
      %1116 = vmatpush1.msra.mxu0 0.0
      %1117 = vmatprep.subr.mxu0 0.0
      %1118 = vmatpush1.msra.mxu0 0.0
      %1119 = vmatprep.subr.mxu0 0.0
      %1120 = vmatpush1.msra.mxu0 0.0
      %1121 = vmatprep.subr.mxu0 0.0
      %1122 = vmatpush1.msra.mxu0 0.0
      %1123 = vmatprep.subr.mxu0 0.0
      %1124 = vmatpush1.msra.mxu0 0.0
      %1125 = vmatprep.subr.mxu0 0.0
      %1126 = vmatpush1.msra.mxu0 0.0
      %1127 = vmatprep.subr.mxu0 0.0
      %1128 = vmatpush1.msra.mxu0 0.0
      %1129 = vmatprep.subr.mxu0 0.0
      %1130 = vmatpush1.msra.mxu0 0.0
      %1131 = vmatprep.subr.mxu0 0.0
      %1132 = vmatpush1.msra.mxu0 0.0
      %1133 = vmatprep.subr.mxu0 0.0
      %1134 = vmatpush1.msra.mxu0 0.0
      %1135 = vmatprep.subr.mxu0 0.0
      %1136 = vmatpush1.msra.mxu0 0.0
      %1137 = vmatprep.subr.mxu0 0.0
      %1138 = vmatpush1.msra.mxu0 0.0
      %1139 = vmatprep.mubr.f32.mxu0 0.0
      %1140 = vmatmul.mubr.f32.gmra.mrb[0].mxu0 %v1070
      %v1141 = vpop.f32.mrb[0].mxu0
      %v1142 = vadd.f32 %v1062, %v1141
      %v1143 = vpop.f32.mrb[0].mxu0
      %1144 = vmatprep.mubr.f32.mxu0 0.0
      %1145 = vmatmul.mubr.f32.gmra.mrb[0].mxu0 %v1073
      %v1146 = vpop.f32.mrb[0].mxu0
      %v1147 = vadd.f32 %v1067, %v1146
      %v1148 = vpop.f32.mrb[0].mxu0
      %1149 = vdwg.mxu0
      %v1150 = vmax.f32 %v1142, 0.0
      %v1151 = vmax.f32 %v1147, 0.0
      %v1153 = vsel %vm388, %v153, 0
      %1155 = vmatprep.subr.mxu0 0.0
      %1156 = vmatpush1.msra.mxu0 %v1150
      %1157 = vmatprep.subr.mxu0 0.0
      %1158 = vmatpush1.msra.mxu0 %v1151
      %1159 = vmatprep.subr.mxu0 0.0
      %1160 = vmatpush1.msra.mxu0 0.0
      %1161 = vmatprep.subr.mxu0 0.0
      %1162 = vmatpush1.msra.mxu0 0.0
      %1163 = vmatprep.subr.mxu0 0.0
      %1164 = vmatpush1.msra.mxu0 0.0
      %1165 = vmatprep.subr.mxu0 0.0
      %1166 = vmatpush1.msra.mxu0 0.0
      %1167 = vmatprep.subr.mxu0 0.0
      %1168 = vmatpush1.msra.mxu0 0.0
      %1169 = vmatprep.subr.mxu0 0.0
      %1170 = vmatpush1.msra.mxu0 0.0
      %1171 = vmatprep.subr.mxu0 0.0
      %1172 = vmatpush1.msra.mxu0 0.0
      %1173 = vmatprep.subr.mxu0 0.0
      %1174 = vmatpush1.msra.mxu0 0.0
      %1175 = vmatprep.subr.mxu0 0.0
      %1176 = vmatpush1.msra.mxu0 0.0
      %1177 = vmatprep.subr.mxu0 0.0
      %1178 = vmatpush1.msra.mxu0 0.0
      %1179 = vmatprep.subr.mxu0 0.0
      %1180 = vmatpush1.msra.mxu0 0.0
      %1181 = vmatprep.subr.mxu0 0.0
      %1182 = vmatpush1.msra.mxu0 0.0
      %1183 = vmatprep.subr.mxu0 0.0
      %1184 = vmatpush1.msra.mxu0 0.0
      %1185 = vmatprep.subr.mxu0 0.0
      %1186 = vmatpush1.msra.mxu0 0.0
      %1187 = vmatprep.subr.mxu0 0.0
      %1188 = vmatpush1.msra.mxu0 0.0
      %1189 = vmatprep.subr.mxu0 0.0
      %1190 = vmatpush1.msra.mxu0 0.0
      %1191 = vmatprep.subr.mxu0 0.0
      %1192 = vmatpush1.msra.mxu0 0.0
      %1193 = vmatprep.subr.mxu0 0.0
      %1194 = vmatpush1.msra.mxu0 0.0
      %1195 = vmatprep.subr.mxu0 0.0
      %1196 = vmatpush1.msra.mxu0 0.0
      %1197 = vmatprep.subr.mxu0 0.0
      %1198 = vmatpush1.msra.mxu0 0.0
      %1199 = vmatprep.subr.mxu0 0.0
      %1200 = vmatpush1.msra.mxu0 0.0
      %1201 = vmatprep.subr.mxu0 0.0
      %1202 = vmatpush1.msra.mxu0 0.0
      %1203 = vmatprep.subr.mxu0 0.0
      %1204 = vmatpush1.msra.mxu0 0.0
      %1205 = vmatprep.subr.mxu0 0.0
      %1206 = vmatpush1.msra.mxu0 0.0
      %1207 = vmatprep.subr.mxu0 0.0
      %1208 = vmatpush1.msra.mxu0 0.0
      %1209 = vmatprep.subr.mxu0 0.0
      %1210 = vmatpush1.msra.mxu0 0.0
      %1211 = vmatprep.subr.mxu0 0.0
      %1212 = vmatpush1.msra.mxu0 0.0
      %1213 = vmatprep.subr.mxu0 0.0
      %1214 = vmatpush1.msra.mxu0 0.0
      %1215 = vmatprep.subr.mxu0 0.0
      %1216 = vmatpush1.msra.mxu0 0.0
      %1217 = vmatprep.subr.mxu0 0.0
      %1218 = vmatpush1.msra.mxu0 0.0
      %1219 = vmatprep.mubr.f32.mxu0 0.0
      %1220 = vmatmul.mubr.f32.gmra.mrb[0].mxu0 %v1153
      %v1221 = vpop.f32.mrb[0].mxu0
      %v1222 = vadd.f32 0.0, %v1221
      %v1223 = vpop.f32.mrb[0].mxu0
      %1224 = vdwg.mxu0
      %1225 = vxpose.xlu0.b32.start [1/16] %v1222, 128
      %1226 = vxpose.xlu0.b32.cont [2/16] 0.0, 128
      %1227 = vxpose.xlu0.b32.cont [3/16] 0.0, 128
      %1228 = vxpose.xlu0.b32.cont [4/16] 0.0, 128
      %1229 = vxpose.xlu0.b32.cont [5/16] 0.0, 128
      %1230 = vxpose.xlu0.b32.cont [6/16] 0.0, 128
      %1231 = vxpose.xlu0.b32.cont [7/16] 0.0, 128
      %1232 = vxpose.xlu0.b32.cont [8/16] 0.0, 128
      %1233 = vxpose.xlu0.b32.cont [9/16] 0.0, 128
      %1234 = vxpose.xlu0.b32.cont [10/16] 0.0, 128
      %1235 = vxpose.xlu0.b32.cont [11/16] 0.0, 128
      %1236 = vxpose.xlu0.b32.cont [12/16] 0.0, 128
      %1237 = vxpose.xlu0.b32.cont [13/16] 0.0, 128
      %1238 = vxpose.xlu0.b32.cont [14/16] 0.0, 128
      %1239 = vxpose.xlu0.b32.cont [15/16] 0.0, 128
      %1240 = vxpose.xlu0.b32.end [16/16] 0.0, 128
      %v1241 = vpop.trf.xlu0
      %v1242 = vpop.trf.xlu0
      %v1243 = vpop.trf.xlu0
      %v1244 = vpop.trf.xlu0
      %v1245 = vpop.trf.xlu0
      %v1246 = vpop.trf.xlu0
      %v1247 = vpop.trf.xlu0
      %v1248 = vpop.trf.xlu0
      %v1249 = vpop.trf.xlu0
      %v1250 = vpop.trf.xlu0
      %v1251 = vpop.trf.xlu0
      %v1252 = vpop.trf.xlu0
      %v1253 = vpop.trf.xlu0
      %v1254 = vpop.trf.xlu0
      %v1255 = vpop.trf.xlu0
      %v1256 = vpop.trf.xlu0
      %v1258 = vsel %vm247, %v155, 0
      %v1261 = vsel %vm247, %v156, 0
      %1263 = vmatprep.subr.mxu0 0.0
      %1264 = vmatpush1.msra.mxu0 %v1241
      %1265 = vmatprep.subr.mxu0 0.0
      %1266 = vmatpush1.msra.mxu0 0.0
      %1267 = vmatprep.subr.mxu0 0.0
      %1268 = vmatpush1.msra.mxu0 0.0
      %1269 = vmatprep.subr.mxu0 0.0
      %1270 = vmatpush1.msra.mxu0 0.0
      %1271 = vmatprep.subr.mxu0 0.0
      %1272 = vmatpush1.msra.mxu0 0.0
      %1273 = vmatprep.subr.mxu0 0.0
      %1274 = vmatpush1.msra.mxu0 0.0
      %1275 = vmatprep.subr.mxu0 0.0
      %1276 = vmatpush1.msra.mxu0 0.0
      %1277 = vmatprep.subr.mxu0 0.0
      %1278 = vmatpush1.msra.mxu0 0.0
      %1279 = vmatprep.subr.mxu0 0.0
      %1280 = vmatpush1.msra.mxu0 0.0
      %1281 = vmatprep.subr.mxu0 0.0
      %1282 = vmatpush1.msra.mxu0 0.0
      %1283 = vmatprep.subr.mxu0 0.0
      %1284 = vmatpush1.msra.mxu0 0.0
      %1285 = vmatprep.subr.mxu0 0.0
      %1286 = vmatpush1.msra.mxu0 0.0
      %1287 = vmatprep.subr.mxu0 0.0
      %1288 = vmatpush1.msra.mxu0 0.0
      %1289 = vmatprep.subr.mxu0 0.0
      %1290 = vmatpush1.msra.mxu0 0.0
      %1291 = vmatprep.subr.mxu0 0.0
      %1292 = vmatpush1.msra.mxu0 0.0
      %1293 = vmatprep.subr.mxu0 0.0
      %1294 = vmatpush1.msra.mxu0 0.0
      %1295 = vmatprep.subr.mxu0 0.0
      %1296 = vmatpush1.msra.mxu0 0.0
      %1297 = vmatprep.subr.mxu0 0.0
      %1298 = vmatpush1.msra.mxu0 0.0
      %1299 = vmatprep.subr.mxu0 0.0
      %1300 = vmatpush1.msra.mxu0 0.0
      %1301 = vmatprep.subr.mxu0 0.0
      %1302 = vmatpush1.msra.mxu0 0.0
      %1303 = vmatprep.subr.mxu0 0.0
      %1304 = vmatpush1.msra.mxu0 0.0
      %1305 = vmatprep.subr.mxu0 0.0
      %1306 = vmatpush1.msra.mxu0 0.0
      %1307 = vmatprep.subr.mxu0 0.0
      %1308 = vmatpush1.msra.mxu0 0.0
      %1309 = vmatprep.subr.mxu0 0.0
      %1310 = vmatpush1.msra.mxu0 0.0
      %1311 = vmatprep.subr.mxu0 0.0
      %1312 = vmatpush1.msra.mxu0 0.0
      %1313 = vmatprep.subr.mxu0 0.0
      %1314 = vmatpush1.msra.mxu0 0.0
      %1315 = vmatprep.subr.mxu0 0.0
      %1316 = vmatpush1.msra.mxu0 0.0
      %1317 = vmatprep.subr.mxu0 0.0
      %1318 = vmatpush1.msra.mxu0 0.0
      %1319 = vmatprep.subr.mxu0 0.0
      %1320 = vmatpush1.msra.mxu0 0.0
      %1321 = vmatprep.subr.mxu0 0.0
      %1322 = vmatpush1.msra.mxu0 0.0
      %1323 = vmatprep.subr.mxu0 0.0
      %1324 = vmatpush1.msra.mxu0 0.0
      %1325 = vmatprep.subr.mxu0 0.0
      %1326 = vmatpush1.msra.mxu0 0.0
      %1327 = vmatprep.mubr.f32.mxu0 0.0
      %1328 = vmatmul.mubr.f32.gmra.mrb[0].mxu0 %v1258
      %v1329 = vpop.f32.mrb[0].mxu0
      %v1330 = vadd.f32 0.0, %v1329
      %v1331 = vpop.f32.mrb[0].mxu0
      %1332 = vmatprep.mubr.f32.mxu0 0.0
      %1333 = vmatmul.mubr.f32.gmra.mrb[0].mxu0 %v1261
      %v1334 = vpop.f32.mrb[0].mxu0
      %v1335 = vadd.f32 0.0, %v1334
      %v1336 = vpop.f32.mrb[0].mxu0
      %1337 = vdwg.mxu0
      %1338 = vmatprep.subr.mxu0 0.0
      %1339 = vmatpush1.msra.mxu0 %v1242
      %1340 = vmatprep.subr.mxu0 0.0
      %1341 = vmatpush1.msra.mxu0 0.0
      %1342 = vmatprep.subr.mxu0 0.0
      %1343 = vmatpush1.msra.mxu0 0.0
      %1344 = vmatprep.subr.mxu0 0.0
      %1345 = vmatpush1.msra.mxu0 0.0
      %1346 = vmatprep.subr.mxu0 0.0
      %1347 = vmatpush1.msra.mxu0 0.0
      %1348 = vmatprep.subr.mxu0 0.0
      %1349 = vmatpush1.msra.mxu0 0.0
      %1350 = vmatprep.subr.mxu0 0.0
      %1351 = vmatpush1.msra.mxu0 0.0
      %1352 = vmatprep.subr.mxu0 0.0
      %1353 = vmatpush1.msra.mxu0 0.0
      %1354 = vmatprep.subr.mxu0 0.0
      %1355 = vmatpush1.msra.mxu0 0.0
      %1356 = vmatprep.subr.mxu0 0.0
      %1357 = vmatpush1.msra.mxu0 0.0
      %1358 = vmatprep.subr.mxu0 0.0
      %1359 = vmatpush1.msra.mxu0 0.0
      %1360 = vmatprep.subr.mxu0 0.0
      %1361 = vmatpush1.msra.mxu0 0.0
      %1362 = vmatprep.subr.mxu0 0.0
      %1363 = vmatpush1.msra.mxu0 0.0
      %1364 = vmatprep.subr.mxu0 0.0
      %1365 = vmatpush1.msra.mxu0 0.0
      %1366 = vmatprep.subr.mxu0 0.0
      %1367 = vmatpush1.msra.mxu0 0.0
      %1368 = vmatprep.subr.mxu0 0.0
      %1369 = vmatpush1.msra.mxu0 0.0
      %1370 = vmatprep.subr.mxu0 0.0
      %1371 = vmatpush1.msra.mxu0 0.0
      %1372 = vmatprep.subr.mxu0 0.0
      %1373 = vmatpush1.msra.mxu0 0.0
      %1374 = vmatprep.subr.mxu0 0.0
      %1375 = vmatpush1.msra.mxu0 0.0
      %1376 = vmatprep.subr.mxu0 0.0
      %1377 = vmatpush1.msra.mxu0 0.0
      %1378 = vmatprep.subr.mxu0 0.0
      %1379 = vmatpush1.msra.mxu0 0.0
      %1380 = vmatprep.subr.mxu0 0.0
      %1381 = vmatpush1.msra.mxu0 0.0
      %1382 = vmatprep.subr.mxu0 0.0
      %1383 = vmatpush1.msra.mxu0 0.0
      %1384 = vmatprep.subr.mxu0 0.0
      %1385 = vmatpush1.msra.mxu0 0.0
      %1386 = vmatprep.subr.mxu0 0.0
      %1387 = vmatpush1.msra.mxu0 0.0
      %1388 = vmatprep.subr.mxu0 0.0
      %1389 = vmatpush1.msra.mxu0 0.0
      %1390 = vmatprep.subr.mxu0 0.0
      %1391 = vmatpush1.msra.mxu0 0.0
      %1392 = vmatprep.subr.mxu0 0.0
      %1393 = vmatpush1.msra.mxu0 0.0
      %1394 = vmatprep.subr.mxu0 0.0
      %1395 = vmatpush1.msra.mxu0 0.0
      %1396 = vmatprep.subr.mxu0 0.0
      %1397 = vmatpush1.msra.mxu0 0.0
      %1398 = vmatprep.subr.mxu0 0.0
      %1399 = vmatpush1.msra.mxu0 0.0
      %1400 = vmatprep.subr.mxu0 0.0
      %1401 = vmatpush1.msra.mxu0 0.0
      %1402 = vmatprep.mubr.f32.mxu0 0.0
      %1403 = vmatmul.mubr.f32.gmra.mrb[0].mxu0 %v1258
      %v1404 = vpop.f32.mrb[0].mxu0
      %v1405 = vadd.f32 0.0, %v1404
      %v1406 = vpop.f32.mrb[0].mxu0
      %1407 = vmatprep.mubr.f32.mxu0 0.0
      %1408 = vmatmul.mubr.f32.gmra.mrb[0].mxu0 %v1261
      %v1409 = vpop.f32.mrb[0].mxu0
      %v1410 = vadd.f32 0.0, %v1409
      %v1411 = vpop.f32.mrb[0].mxu0
      %1412 = vdwg.mxu0
      %1413 = vmatprep.subr.mxu0 0.0
      %1414 = vmatpush1.msra.mxu0 %v1243
      %1415 = vmatprep.subr.mxu0 0.0
      %1416 = vmatpush1.msra.mxu0 0.0
      %1417 = vmatprep.subr.mxu0 0.0
      %1418 = vmatpush1.msra.mxu0 0.0
      %1419 = vmatprep.subr.mxu0 0.0
      %1420 = vmatpush1.msra.mxu0 0.0
      %1421 = vmatprep.subr.mxu0 0.0
      %1422 = vmatpush1.msra.mxu0 0.0
      %1423 = vmatprep.subr.mxu0 0.0
      %1424 = vmatpush1.msra.mxu0 0.0
      %1425 = vmatprep.subr.mxu0 0.0
      %1426 = vmatpush1.msra.mxu0 0.0
      %1427 = vmatprep.subr.mxu0 0.0
      %1428 = vmatpush1.msra.mxu0 0.0
      %1429 = vmatprep.subr.mxu0 0.0
      %1430 = vmatpush1.msra.mxu0 0.0
      %1431 = vmatprep.subr.mxu0 0.0
      %1432 = vmatpush1.msra.mxu0 0.0
      %1433 = vmatprep.subr.mxu0 0.0
      %1434 = vmatpush1.msra.mxu0 0.0
      %1435 = vmatprep.subr.mxu0 0.0
      %1436 = vmatpush1.msra.mxu0 0.0
      %1437 = vmatprep.subr.mxu0 0.0
      %1438 = vmatpush1.msra.mxu0 0.0
      %1439 = vmatprep.subr.mxu0 0.0
      %1440 = vmatpush1.msra.mxu0 0.0
      %1441 = vmatprep.subr.mxu0 0.0
      %1442 = vmatpush1.msra.mxu0 0.0
      %1443 = vmatprep.subr.mxu0 0.0
      %1444 = vmatpush1.msra.mxu0 0.0
      %1445 = vmatprep.subr.mxu0 0.0
      %1446 = vmatpush1.msra.mxu0 0.0
      %1447 = vmatprep.subr.mxu0 0.0
      %1448 = vmatpush1.msra.mxu0 0.0
      %1449 = vmatprep.subr.mxu0 0.0
      %1450 = vmatpush1.msra.mxu0 0.0
      %1451 = vmatprep.subr.mxu0 0.0
      %1452 = vmatpush1.msra.mxu0 0.0
      %1453 = vmatprep.subr.mxu0 0.0
      %1454 = vmatpush1.msra.mxu0 0.0
      %1455 = vmatprep.subr.mxu0 0.0
      %1456 = vmatpush1.msra.mxu0 0.0
      %1457 = vmatprep.subr.mxu0 0.0
      %1458 = vmatpush1.msra.mxu0 0.0
      %1459 = vmatprep.subr.mxu0 0.0
      %1460 = vmatpush1.msra.mxu0 0.0
      %1461 = vmatprep.subr.mxu0 0.0
      %1462 = vmatpush1.msra.mxu0 0.0
      %1463 = vmatprep.subr.mxu0 0.0
      %1464 = vmatpush1.msra.mxu0 0.0
      %1465 = vmatprep.subr.mxu0 0.0
      %1466 = vmatpush1.msra.mxu0 0.0
      %1467 = vmatprep.subr.mxu0 0.0
      %1468 = vmatpush1.msra.mxu0 0.0
      %1469 = vmatprep.subr.mxu0 0.0
      %1470 = vmatpush1.msra.mxu0 0.0
      %1471 = vmatprep.subr.mxu0 0.0
      %1472 = vmatpush1.msra.mxu0 0.0
      %1473 = vmatprep.subr.mxu0 0.0
      %1474 = vmatpush1.msra.mxu0 0.0
      %1475 = vmatprep.subr.mxu0 0.0
      %1476 = vmatpush1.msra.mxu0 0.0
      %1477 = vmatprep.mubr.f32.mxu0 0.0
      %1478 = vmatmul.mubr.f32.gmra.mrb[0].mxu0 %v1258
      %v1479 = vpop.f32.mrb[0].mxu0
      %v1480 = vadd.f32 0.0, %v1479
      %v1481 = vpop.f32.mrb[0].mxu0
      %1482 = vmatprep.mubr.f32.mxu0 0.0
      %1483 = vmatmul.mubr.f32.gmra.mrb[0].mxu0 %v1261
      %v1484 = vpop.f32.mrb[0].mxu0
      %v1485 = vadd.f32 0.0, %v1484
      %v1486 = vpop.f32.mrb[0].mxu0
      %1487 = vdwg.mxu0
      %1488 = vmatprep.subr.mxu0 0.0
      %1489 = vmatpush1.msra.mxu0 %v1244
      %1490 = vmatprep.subr.mxu0 0.0
      %1491 = vmatpush1.msra.mxu0 0.0
      %1492 = vmatprep.subr.mxu0 0.0
      %1493 = vmatpush1.msra.mxu0 0.0
      %1494 = vmatprep.subr.mxu0 0.0
      %1495 = vmatpush1.msra.mxu0 0.0
      %1496 = vmatprep.subr.mxu0 0.0
      %1497 = vmatpush1.msra.mxu0 0.0
      %1498 = vmatprep.subr.mxu0 0.0
      %1499 = vmatpush1.msra.mxu0 0.0
      %1500 = vmatprep.subr.mxu0 0.0
      %1501 = vmatpush1.msra.mxu0 0.0
      %1502 = vmatprep.subr.mxu0 0.0
      %1503 = vmatpush1.msra.mxu0 0.0
      %1504 = vmatprep.subr.mxu0 0.0
      %1505 = vmatpush1.msra.mxu0 0.0
      %1506 = vmatprep.subr.mxu0 0.0
      %1507 = vmatpush1.msra.mxu0 0.0
      %1508 = vmatprep.subr.mxu0 0.0
      %1509 = vmatpush1.msra.mxu0 0.0
      %1510 = vmatprep.subr.mxu0 0.0
      %1511 = vmatpush1.msra.mxu0 0.0
      %1512 = vmatprep.subr.mxu0 0.0
      %1513 = vmatpush1.msra.mxu0 0.0
      %1514 = vmatprep.subr.mxu0 0.0
      %1515 = vmatpush1.msra.mxu0 0.0
      %1516 = vmatprep.subr.mxu0 0.0
      %1517 = vmatpush1.msra.mxu0 0.0
      %1518 = vmatprep.subr.mxu0 0.0
      %1519 = vmatpush1.msra.mxu0 0.0
      %1520 = vmatprep.subr.mxu0 0.0
      %1521 = vmatpush1.msra.mxu0 0.0
      %1522 = vmatprep.subr.mxu0 0.0
      %1523 = vmatpush1.msra.mxu0 0.0
      %1524 = vmatprep.subr.mxu0 0.0
      %1525 = vmatpush1.msra.mxu0 0.0
      %1526 = vmatprep.subr.mxu0 0.0
      %1527 = vmatpush1.msra.mxu0 0.0
      %1528 = vmatprep.subr.mxu0 0.0
      %1529 = vmatpush1.msra.mxu0 0.0
      %1530 = vmatprep.subr.mxu0 0.0
      %1531 = vmatpush1.msra.mxu0 0.0
      %1532 = vmatprep.subr.mxu0 0.0
      %1533 = vmatpush1.msra.mxu0 0.0
      %1534 = vmatprep.subr.mxu0 0.0
      %1535 = vmatpush1.msra.mxu0 0.0
      %1536 = vmatprep.subr.mxu0 0.0
      %1537 = vmatpush1.msra.mxu0 0.0
      %1538 = vmatprep.subr.mxu0 0.0
      %1539 = vmatpush1.msra.mxu0 0.0
      %1540 = vmatprep.subr.mxu0 0.0
      %1541 = vmatpush1.msra.mxu0 0.0
      %1542 = vmatprep.subr.mxu0 0.0
      %1543 = vmatpush1.msra.mxu0 0.0
      %1544 = vmatprep.subr.mxu0 0.0
      %1545 = vmatpush1.msra.mxu0 0.0
      %1546 = vmatprep.subr.mxu0 0.0
      %1547 = vmatpush1.msra.mxu0 0.0
      %1548 = vmatprep.subr.mxu0 0.0
      %1549 = vmatpush1.msra.mxu0 0.0
      %1550 = vmatprep.subr.mxu0 0.0
      %1551 = vmatpush1.msra.mxu0 0.0
      %1552 = vmatprep.mubr.f32.mxu0 0.0
      %1553 = vmatmul.mubr.f32.gmra.mrb[0].mxu0 %v1258
      %v1554 = vpop.f32.mrb[0].mxu0
      %v1555 = vadd.f32 0.0, %v1554
      %v1556 = vpop.f32.mrb[0].mxu0
      %1557 = vmatprep.mubr.f32.mxu0 0.0
      %1558 = vmatmul.mubr.f32.gmra.mrb[0].mxu0 %v1261
      %v1559 = vpop.f32.mrb[0].mxu0
      %v1560 = vadd.f32 0.0, %v1559
      %v1561 = vpop.f32.mrb[0].mxu0
      %1562 = vdwg.mxu0
      %1563 = vmatprep.subr.mxu0 0.0
      %1564 = vmatpush1.msra.mxu0 %v1245
      %1565 = vmatprep.subr.mxu0 0.0
      %1566 = vmatpush1.msra.mxu0 0.0
      %1567 = vmatprep.subr.mxu0 0.0
      %1568 = vmatpush1.msra.mxu0 0.0
      %1569 = vmatprep.subr.mxu0 0.0
      %1570 = vmatpush1.msra.mxu0 0.0
      %1571 = vmatprep.subr.mxu0 0.0
      %1572 = vmatpush1.msra.mxu0 0.0
      %1573 = vmatprep.subr.mxu0 0.0
      %1574 = vmatpush1.msra.mxu0 0.0
      %1575 = vmatprep.subr.mxu0 0.0
      %1576 = vmatpush1.msra.mxu0 0.0
      %1577 = vmatprep.subr.mxu0 0.0
      %1578 = vmatpush1.msra.mxu0 0.0
      %1579 = vmatprep.subr.mxu0 0.0
      %1580 = vmatpush1.msra.mxu0 0.0
      %1581 = vmatprep.subr.mxu0 0.0
      %1582 = vmatpush1.msra.mxu0 0.0
      %1583 = vmatprep.subr.mxu0 0.0
      %1584 = vmatpush1.msra.mxu0 0.0
      %1585 = vmatprep.subr.mxu0 0.0
      %1586 = vmatpush1.msra.mxu0 0.0
      %1587 = vmatprep.subr.mxu0 0.0
      %1588 = vmatpush1.msra.mxu0 0.0
      %1589 = vmatprep.subr.mxu0 0.0
      %1590 = vmatpush1.msra.mxu0 0.0
      %1591 = vmatprep.subr.mxu0 0.0
      %1592 = vmatpush1.msra.mxu0 0.0
      %1593 = vmatprep.subr.mxu0 0.0
      %1594 = vmatpush1.msra.mxu0 0.0
      %1595 = vmatprep.subr.mxu0 0.0
      %1596 = vmatpush1.msra.mxu0 0.0
      %1597 = vmatprep.subr.mxu0 0.0
      %1598 = vmatpush1.msra.mxu0 0.0
      %1599 = vmatprep.subr.mxu0 0.0
      %1600 = vmatpush1.msra.mxu0 0.0
      %1601 = vmatprep.subr.mxu0 0.0
      %1602 = vmatpush1.msra.mxu0 0.0
      %1603 = vmatprep.subr.mxu0 0.0
      %1604 = vmatpush1.msra.mxu0 0.0
      %1605 = vmatprep.subr.mxu0 0.0
      %1606 = vmatpush1.msra.mxu0 0.0
      %1607 = vmatprep.subr.mxu0 0.0
      %1608 = vmatpush1.msra.mxu0 0.0
      %1609 = vmatprep.subr.mxu0 0.0
      %1610 = vmatpush1.msra.mxu0 0.0
      %1611 = vmatprep.subr.mxu0 0.0
      %1612 = vmatpush1.msra.mxu0 0.0
      %1613 = vmatprep.subr.mxu0 0.0
      %1614 = vmatpush1.msra.mxu0 0.0
      %1615 = vmatprep.subr.mxu0 0.0
      %1616 = vmatpush1.msra.mxu0 0.0
      %1617 = vmatprep.subr.mxu0 0.0
      %1618 = vmatpush1.msra.mxu0 0.0
      %1619 = vmatprep.subr.mxu0 0.0
      %1620 = vmatpush1.msra.mxu0 0.0
      %1621 = vmatprep.subr.mxu0 0.0
      %1622 = vmatpush1.msra.mxu0 0.0
      %1623 = vmatprep.subr.mxu0 0.0
      %1624 = vmatpush1.msra.mxu0 0.0
      %1625 = vmatprep.subr.mxu0 0.0
      %1626 = vmatpush1.msra.mxu0 0.0
      %1627 = vmatprep.mubr.f32.mxu0 0.0
      %1628 = vmatmul.mubr.f32.gmra.mrb[0].mxu0 %v1258
      %v1629 = vpop.f32.mrb[0].mxu0
      %v1630 = vadd.f32 0.0, %v1629
      %v1631 = vpop.f32.mrb[0].mxu0
      %1632 = vmatprep.mubr.f32.mxu0 0.0
      %1633 = vmatmul.mubr.f32.gmra.mrb[0].mxu0 %v1261
      %v1634 = vpop.f32.mrb[0].mxu0
      %v1635 = vadd.f32 0.0, %v1634
      %v1636 = vpop.f32.mrb[0].mxu0
      %1637 = vdwg.mxu0
      %1638 = vmatprep.subr.mxu0 0.0
      %1639 = vmatpush1.msra.mxu0 %v1246
      %1640 = vmatprep.subr.mxu0 0.0
      %1641 = vmatpush1.msra.mxu0 0.0
      %1642 = vmatprep.subr.mxu0 0.0
      %1643 = vmatpush1.msra.mxu0 0.0
      %1644 = vmatprep.subr.mxu0 0.0
      %1645 = vmatpush1.msra.mxu0 0.0
      %1646 = vmatprep.subr.mxu0 0.0
      %1647 = vmatpush1.msra.mxu0 0.0
      %1648 = vmatprep.subr.mxu0 0.0
      %1649 = vmatpush1.msra.mxu0 0.0
      %1650 = vmatprep.subr.mxu0 0.0
      %1651 = vmatpush1.msra.mxu0 0.0
      %1652 = vmatprep.subr.mxu0 0.0
      %1653 = vmatpush1.msra.mxu0 0.0
      %1654 = vmatprep.subr.mxu0 0.0
      %1655 = vmatpush1.msra.mxu0 0.0
      %1656 = vmatprep.subr.mxu0 0.0
      %1657 = vmatpush1.msra.mxu0 0.0
      %1658 = vmatprep.subr.mxu0 0.0
      %1659 = vmatpush1.msra.mxu0 0.0
      %1660 = vmatprep.subr.mxu0 0.0
      %1661 = vmatpush1.msra.mxu0 0.0
      %1662 = vmatprep.subr.mxu0 0.0
      %1663 = vmatpush1.msra.mxu0 0.0
      %1664 = vmatprep.subr.mxu0 0.0
      %1665 = vmatpush1.msra.mxu0 0.0
      %1666 = vmatprep.subr.mxu0 0.0
      %1667 = vmatpush1.msra.mxu0 0.0
      %1668 = vmatprep.subr.mxu0 0.0
      %1669 = vmatpush1.msra.mxu0 0.0
      %1670 = vmatprep.subr.mxu0 0.0
      %1671 = vmatpush1.msra.mxu0 0.0
      %1672 = vmatprep.subr.mxu0 0.0
      %1673 = vmatpush1.msra.mxu0 0.0
      %1674 = vmatprep.subr.mxu0 0.0
      %1675 = vmatpush1.msra.mxu0 0.0
      %1676 = vmatprep.subr.mxu0 0.0
      %1677 = vmatpush1.msra.mxu0 0.0
      %1678 = vmatprep.subr.mxu0 0.0
      %1679 = vmatpush1.msra.mxu0 0.0
      %1680 = vmatprep.subr.mxu0 0.0
      %1681 = vmatpush1.msra.mxu0 0.0
      %1682 = vmatprep.subr.mxu0 0.0
      %1683 = vmatpush1.msra.mxu0 0.0
      %1684 = vmatprep.subr.mxu0 0.0
      %1685 = vmatpush1.msra.mxu0 0.0
      %1686 = vmatprep.subr.mxu0 0.0
      %1687 = vmatpush1.msra.mxu0 0.0
      %1688 = vmatprep.subr.mxu0 0.0
      %1689 = vmatpush1.msra.mxu0 0.0
      %1690 = vmatprep.subr.mxu0 0.0
      %1691 = vmatpush1.msra.mxu0 0.0
      %1692 = vmatprep.subr.mxu0 0.0
      %1693 = vmatpush1.msra.mxu0 0.0
      %1694 = vmatprep.subr.mxu0 0.0
      %1695 = vmatpush1.msra.mxu0 0.0
      %1696 = vmatprep.subr.mxu0 0.0
      %1697 = vmatpush1.msra.mxu0 0.0
      %1698 = vmatprep.subr.mxu0 0.0
      %1699 = vmatpush1.msra.mxu0 0.0
      %1700 = vmatprep.subr.mxu0 0.0
      %1701 = vmatpush1.msra.mxu0 0.0
      %1702 = vmatprep.mubr.f32.mxu0 0.0
      %1703 = vmatmul.mubr.f32.gmra.mrb[0].mxu0 %v1258
      %v1704 = vpop.f32.mrb[0].mxu0
      %v1705 = vadd.f32 0.0, %v1704
      %v1706 = vpop.f32.mrb[0].mxu0
      %1707 = vmatprep.mubr.f32.mxu0 0.0
      %1708 = vmatmul.mubr.f32.gmra.mrb[0].mxu0 %v1261
      %v1709 = vpop.f32.mrb[0].mxu0
      %v1710 = vadd.f32 0.0, %v1709
      %v1711 = vpop.f32.mrb[0].mxu0
      %1712 = vdwg.mxu0
      %1713 = vmatprep.subr.mxu0 0.0
      %1714 = vmatpush1.msra.mxu0 %v1247
      %1715 = vmatprep.subr.mxu0 0.0
      %1716 = vmatpush1.msra.mxu0 0.0
      %1717 = vmatprep.subr.mxu0 0.0
      %1718 = vmatpush1.msra.mxu0 0.0
      %1719 = vmatprep.subr.mxu0 0.0
      %1720 = vmatpush1.msra.mxu0 0.0
      %1721 = vmatprep.subr.mxu0 0.0
      %1722 = vmatpush1.msra.mxu0 0.0
      %1723 = vmatprep.subr.mxu0 0.0
      %1724 = vmatpush1.msra.mxu0 0.0
      %1725 = vmatprep.subr.mxu0 0.0
      %1726 = vmatpush1.msra.mxu0 0.0
      %1727 = vmatprep.subr.mxu0 0.0
      %1728 = vmatpush1.msra.mxu0 0.0
      %1729 = vmatprep.subr.mxu0 0.0
      %1730 = vmatpush1.msra.mxu0 0.0
      %1731 = vmatprep.subr.mxu0 0.0
      %1732 = vmatpush1.msra.mxu0 0.0
      %1733 = vmatprep.subr.mxu0 0.0
      %1734 = vmatpush1.msra.mxu0 0.0
      %1735 = vmatprep.subr.mxu0 0.0
      %1736 = vmatpush1.msra.mxu0 0.0
      %1737 = vmatprep.subr.mxu0 0.0
      %1738 = vmatpush1.msra.mxu0 0.0
      %1739 = vmatprep.subr.mxu0 0.0
      %1740 = vmatpush1.msra.mxu0 0.0
      %1741 = vmatprep.subr.mxu0 0.0
      %1742 = vmatpush1.msra.mxu0 0.0
      %1743 = vmatprep.subr.mxu0 0.0
      %1744 = vmatpush1.msra.mxu0 0.0
      %1745 = vmatprep.subr.mxu0 0.0
      %1746 = vmatpush1.msra.mxu0 0.0
      %1747 = vmatprep.subr.mxu0 0.0
      %1748 = vmatpush1.msra.mxu0 0.0
      %1749 = vmatprep.subr.mxu0 0.0
      %1750 = vmatpush1.msra.mxu0 0.0
      %1751 = vmatprep.subr.mxu0 0.0
      %1752 = vmatpush1.msra.mxu0 0.0
      %1753 = vmatprep.subr.mxu0 0.0
      %1754 = vmatpush1.msra.mxu0 0.0
      %1755 = vmatprep.subr.mxu0 0.0
      %1756 = vmatpush1.msra.mxu0 0.0
      %1757 = vmatprep.subr.mxu0 0.0
      %1758 = vmatpush1.msra.mxu0 0.0
      %1759 = vmatprep.subr.mxu0 0.0
      %1760 = vmatpush1.msra.mxu0 0.0
      %1761 = vmatprep.subr.mxu0 0.0
      %1762 = vmatpush1.msra.mxu0 0.0
      %1763 = vmatprep.subr.mxu0 0.0
      %1764 = vmatpush1.msra.mxu0 0.0
      %1765 = vmatprep.subr.mxu0 0.0
      %1766 = vmatpush1.msra.mxu0 0.0
      %1767 = vmatprep.subr.mxu0 0.0
      %1768 = vmatpush1.msra.mxu0 0.0
      %1769 = vmatprep.subr.mxu0 0.0
      %1770 = vmatpush1.msra.mxu0 0.0
      %1771 = vmatprep.subr.mxu0 0.0
      %1772 = vmatpush1.msra.mxu0 0.0
      %1773 = vmatprep.subr.mxu0 0.0
      %1774 = vmatpush1.msra.mxu0 0.0
      %1775 = vmatprep.subr.mxu0 0.0
      %1776 = vmatpush1.msra.mxu0 0.0
      %1777 = vmatprep.mubr.f32.mxu0 0.0
      %1778 = vmatmul.mubr.f32.gmra.mrb[0].mxu0 %v1258
      %v1779 = vpop.f32.mrb[0].mxu0
      %v1780 = vadd.f32 0.0, %v1779
      %v1781 = vpop.f32.mrb[0].mxu0
      %1782 = vmatprep.mubr.f32.mxu0 0.0
      %1783 = vmatmul.mubr.f32.gmra.mrb[0].mxu0 %v1261
      %v1784 = vpop.f32.mrb[0].mxu0
      %v1785 = vadd.f32 0.0, %v1784
      %v1786 = vpop.f32.mrb[0].mxu0
      %1787 = vdwg.mxu0
      %1788 = vmatprep.subr.mxu0 0.0
      %1789 = vmatpush1.msra.mxu0 %v1248
      %1790 = vmatprep.subr.mxu0 0.0
      %1791 = vmatpush1.msra.mxu0 0.0
      %1792 = vmatprep.subr.mxu0 0.0
      %1793 = vmatpush1.msra.mxu0 0.0
      %1794 = vmatprep.subr.mxu0 0.0
      %1795 = vmatpush1.msra.mxu0 0.0
      %1796 = vmatprep.subr.mxu0 0.0
      %1797 = vmatpush1.msra.mxu0 0.0
      %1798 = vmatprep.subr.mxu0 0.0
      %1799 = vmatpush1.msra.mxu0 0.0
      %1800 = vmatprep.subr.mxu0 0.0
      %1801 = vmatpush1.msra.mxu0 0.0
      %1802 = vmatprep.subr.mxu0 0.0
      %1803 = vmatpush1.msra.mxu0 0.0
      %1804 = vmatprep.subr.mxu0 0.0
      %1805 = vmatpush1.msra.mxu0 0.0
      %1806 = vmatprep.subr.mxu0 0.0
      %1807 = vmatpush1.msra.mxu0 0.0
      %1808 = vmatprep.subr.mxu0 0.0
      %1809 = vmatpush1.msra.mxu0 0.0
      %1810 = vmatprep.subr.mxu0 0.0
      %1811 = vmatpush1.msra.mxu0 0.0
      %1812 = vmatprep.subr.mxu0 0.0
      %1813 = vmatpush1.msra.mxu0 0.0
      %1814 = vmatprep.subr.mxu0 0.0
      %1815 = vmatpush1.msra.mxu0 0.0
      %1816 = vmatprep.subr.mxu0 0.0
      %1817 = vmatpush1.msra.mxu0 0.0
      %1818 = vmatprep.subr.mxu0 0.0
      %1819 = vmatpush1.msra.mxu0 0.0
      %1820 = vmatprep.subr.mxu0 0.0
      %1821 = vmatpush1.msra.mxu0 0.0
      %1822 = vmatprep.subr.mxu0 0.0
      %1823 = vmatpush1.msra.mxu0 0.0
      %1824 = vmatprep.subr.mxu0 0.0
      %1825 = vmatpush1.msra.mxu0 0.0
      %1826 = vmatprep.subr.mxu0 0.0
      %1827 = vmatpush1.msra.mxu0 0.0
      %1828 = vmatprep.subr.mxu0 0.0
      %1829 = vmatpush1.msra.mxu0 0.0
      %1830 = vmatprep.subr.mxu0 0.0
      %1831 = vmatpush1.msra.mxu0 0.0
      %1832 = vmatprep.subr.mxu0 0.0
      %1833 = vmatpush1.msra.mxu0 0.0
      %1834 = vmatprep.subr.mxu0 0.0
      %1835 = vmatpush1.msra.mxu0 0.0
      %1836 = vmatprep.subr.mxu0 0.0
      %1837 = vmatpush1.msra.mxu0 0.0
      %1838 = vmatprep.subr.mxu0 0.0
      %1839 = vmatpush1.msra.mxu0 0.0
      %1840 = vmatprep.subr.mxu0 0.0
      %1841 = vmatpush1.msra.mxu0 0.0
      %1842 = vmatprep.subr.mxu0 0.0
      %1843 = vmatpush1.msra.mxu0 0.0
      %1844 = vmatprep.subr.mxu0 0.0
      %1845 = vmatpush1.msra.mxu0 0.0
      %1846 = vmatprep.subr.mxu0 0.0
      %1847 = vmatpush1.msra.mxu0 0.0
      %1848 = vmatprep.subr.mxu0 0.0
      %1849 = vmatpush1.msra.mxu0 0.0
      %1850 = vmatprep.subr.mxu0 0.0
      %1851 = vmatpush1.msra.mxu0 0.0
      %1852 = vmatprep.mubr.f32.mxu0 0.0
      %1853 = vmatmul.mubr.f32.gmra.mrb[0].mxu0 %v1258
      %v1854 = vpop.f32.mrb[0].mxu0
      %v1855 = vadd.f32 0.0, %v1854
      %v1856 = vpop.f32.mrb[0].mxu0
      %1857 = vmatprep.mubr.f32.mxu0 0.0
      %1858 = vmatmul.mubr.f32.gmra.mrb[0].mxu0 %v1261
      %v1859 = vpop.f32.mrb[0].mxu0
      %v1860 = vadd.f32 0.0, %v1859
      %v1861 = vpop.f32.mrb[0].mxu0
      %1862 = vdwg.mxu0
      %v1863 = vmul.f32 %v1330, 0.75
      %v1864 = vmul.f32 %v1335, 0.75
      %v1865 = vmul.f32 %v1405, 0.75
      %v1866 = vmul.f32 %v1410, 0.75
      %v1867 = vmul.f32 %v1480, 0.75
      %v1868 = vmul.f32 %v1485, 0.75
      %v1869 = vmul.f32 %v1555, 0.75
      %v1870 = vmul.f32 %v1560, 0.75
      %v1871 = vmul.f32 %v1630, 0.75
      %v1872 = vmul.f32 %v1635, 0.75
      %v1873 = vmul.f32 %v1705, 0.75
      %v1874 = vmul.f32 %v1710, 0.75
      %v1875 = vmul.f32 %v1780, 0.75
      %v1876 = vmul.f32 %v1785, 0.75
      %v1877 = vmul.f32 %v1855, 0.75
      %v1878 = vmul.f32 %v1860, 0.75
      %v1879 = vmul.f32 %v1330, 0.25
      %v1880 = vmul.f32 %v1335, 0.25
      %v1881 = vmul.f32 %v1405, 0.25
      %v1882 = vmul.f32 %v1410, 0.25
      %v1883 = vmul.f32 %v1480, 0.25
      %v1884 = vmul.f32 %v1485, 0.25
      %v1885 = vmul.f32 %v1555, 0.25
      %v1886 = vmul.f32 %v1560, 0.25
      %v1887 = vmul.f32 %v1630, 0.25
      %v1888 = vmul.f32 %v1635, 0.25
      %v1889 = vmul.f32 %v1705, 0.25
      %v1890 = vmul.f32 %v1710, 0.25
      %v1891 = vmul.f32 %v1780, 0.25
      %v1892 = vmul.f32 %v1785, 0.25
      %v1893 = vadd.f32 %v1863, %v1879
      %v1894 = vadd.f32 %v1864, %v1880
      %v1895 = vadd.f32 %v1865, %v1879
      %v1896 = vadd.f32 %v1866, %v1880
      %v1897 = vadd.f32 %v1867, %v1881
      %v1898 = vadd.f32 %v1868, %v1882
      %v1899 = vadd.f32 %v1869, %v1883
      %v1900 = vadd.f32 %v1870, %v1884
      %v1901 = vadd.f32 %v1871, %v1885
      %v1902 = vadd.f32 %v1872, %v1886
      %v1903 = vadd.f32 %v1873, %v1887
      %v1904 = vadd.f32 %v1874, %v1888
      %v1905 = vadd.f32 %v1875, %v1889
      %v1906 = vadd.f32 %v1876, %v1890
      %v1907 = vadd.f32 %v1877, %v1891
      %v1908 = vadd.f32 %v1878, %v1892
      %v1909 = vmul.f32 %v1855, 0.25
      %v1910 = vmul.f32 %v1860, 0.25
      %v1911 = vadd.f32 %v1863, %v1881
      %v1912 = vadd.f32 %v1864, %v1882
      %v1913 = vadd.f32 %v1865, %v1883
      %v1914 = vadd.f32 %v1866, %v1884
      %v1915 = vadd.f32 %v1867, %v1885
      %v1916 = vadd.f32 %v1868, %v1886
      %v1917 = vadd.f32 %v1869, %v1887
      %v1918 = vadd.f32 %v1870, %v1888
      %v1919 = vadd.f32 %v1871, %v1889
      %v1920 = vadd.f32 %v1872, %v1890
      %v1921 = vadd.f32 %v1873, %v1891
      %v1922 = vadd.f32 %v1874, %v1892
      %v1923 = vadd.f32 %v1875, %v1909
      %v1924 = vadd.f32 %v1876, %v1910
      %v1925 = vadd.f32 %v1877, %v1909
      %v1926 = vadd.f32 %v1878, %v1910
      %1927 = vxpose.xlu0.b32.start [1/16] %v1893, 128
      %1928 = vxpose.xlu0.b32.cont [2/16] %v1894, 128
      %1929 = vxpose.xlu0.b32.cont [3/16] %v1911, 128
      %1930 = vxpose.xlu0.b32.cont [4/16] %v1912, 128
      %1931 = vxpose.xlu0.b32.cont [5/16] %v1895, 128
      %1932 = vxpose.xlu0.b32.cont [6/16] %v1896, 128
      %1933 = vxpose.xlu0.b32.cont [7/16] %v1913, 128
      %1934 = vxpose.xlu0.b32.cont [8/16] %v1914, 128
      %1935 = vxpose.xlu0.b32.cont [9/16] %v1897, 128
      %1936 = vxpose.xlu0.b32.cont [10/16] %v1898, 128
      %1937 = vxpose.xlu0.b32.cont [11/16] %v1915, 128
      %1938 = vxpose.xlu0.b32.cont [12/16] %v1916, 128
      %1939 = vxpose.xlu0.b32.cont [13/16] %v1899, 128
      %1940 = vxpose.xlu0.b32.cont [14/16] %v1900, 128
      %1941 = vxpose.xlu0.b32.cont [15/16] %v1917, 128
      %1942 = vxpose.xlu0.b32.end [16/16] %v1918, 128
      %v1943 = vpop.trf.xlu0
      %v1944 = vpop.trf.xlu0
      %v1945 = vpop.trf.xlu0
      %v1946 = vpop.trf.xlu0
      %v1947 = vpop.trf.xlu0
      %v1948 = vpop.trf.xlu0
      %v1949 = vpop.trf.xlu0
      %v1950 = vpop.trf.xlu0
      %v1951 = vpop.trf.xlu0
      %v1952 = vpop.trf.xlu0
      %v1953 = vpop.trf.xlu0
      %v1954 = vpop.trf.xlu0
      %v1955 = vpop.trf.xlu0
      %v1956 = vpop.trf.xlu0
      %v1957 = vpop.trf.xlu0
      %v1958 = vpop.trf.xlu0
      %1959 = vxpose.xlu0.b32.start [1/16] %v1901, 128
      %1960 = vxpose.xlu0.b32.cont [2/16] %v1902, 128
      %1961 = vxpose.xlu0.b32.cont [3/16] %v1919, 128
      %1962 = vxpose.xlu0.b32.cont [4/16] %v1920, 128
      %1963 = vxpose.xlu0.b32.cont [5/16] %v1903, 128
      %1964 = vxpose.xlu0.b32.cont [6/16] %v1904, 128
      %1965 = vxpose.xlu0.b32.cont [7/16] %v1921, 128
      %1966 = vxpose.xlu0.b32.cont [8/16] %v1922, 128
      %1967 = vxpose.xlu0.b32.cont [9/16] %v1905, 128
      %1968 = vxpose.xlu0.b32.cont [10/16] %v1906, 128
      %1969 = vxpose.xlu0.b32.cont [11/16] %v1923, 128
      %1970 = vxpose.xlu0.b32.cont [12/16] %v1924, 128
      %1971 = vxpose.xlu0.b32.cont [13/16] %v1907, 128
      %1972 = vxpose.xlu0.b32.cont [14/16] %v1908, 128
      %1973 = vxpose.xlu0.b32.cont [15/16] %v1925, 128
      %1974 = vxpose.xlu0.b32.end [16/16] %v1926, 128
      %v1975 = vpop.trf.xlu0
      %v1976 = vpop.trf.xlu0
      %v1977 = vpop.trf.xlu0
      %v1978 = vpop.trf.xlu0
      %v1979 = vpop.trf.xlu0
      %v1980 = vpop.trf.xlu0
      %v1981 = vpop.trf.xlu0
      %v1982 = vpop.trf.xlu0
      %v1983 = vpop.trf.xlu0
      %v1984 = vpop.trf.xlu0
      %v1985 = vpop.trf.xlu0
      %v1986 = vpop.trf.xlu0
      %v1987 = vpop.trf.xlu0
      %v1988 = vpop.trf.xlu0
      %v1989 = vpop.trf.xlu0
      %v1990 = vpop.trf.xlu0
      %1991 = vst [vmem:[%s143] sm:$0xff] %v1943
      %1992 = vst [vmem:[%s143 + $0x8] sm:$0xff] %v1975
      %p1993 = scmp.lt.s32.totalorder %s13, 1
      %s1994 = scalar_select %p1993, %s13, 1
      %s1995 = smul.addr %s1994, 2
      %s1996 = smul.addr %s1995, 8
      %s1997 = scalar_lea.vmem %s2, %s1996
      // Predicated region
      $region29: #{nddr_cnn_forward.1} parent=27 // pred_check
        %p1998 = pneg %p78
      $region30: #{nddr_cnn_forward.1} parent=27 // pred_check_branch
        %2000 = sbr.rel (%p1998) target = $region32
      $region31: #{nddr_cnn_forward.1} parent=27 // pred_region
        _
      $region32: #{nddr_cnn_forward.1} parent=27 // pred_fallthru
        _
    $region28: #{nddr_cnn_forward.1} parent=5 // pred_fallthru
      _
    %p2001 = scmp.le.s32.totalorder 2, %s8
    // Predicated region
    $region33: #{nddr_cnn_forward.1} parent=5 // pred_check
      %p2002 = pneg %p2001
    $region34: #{nddr_cnn_forward.1} parent=5 // pred_check_branch
      %2004 = sbr.rel (%p2002) target = $region36
    $region35: #{nddr_cnn_forward.1} parent=5 // pred_region
      %s2005 = ssub.s32 %s8, 2
      // Predicated region
      $region37: #{nddr_cnn_forward.1} parent=35 // pred_check
        %p2006 = pneg %p84
      $region38: #{nddr_cnn_forward.1} parent=35 // pred_check_branch
        %2008 = sbr.rel (%p2006) target = $region40
      $region39: #{nddr_cnn_forward.1} parent=35 // pred_region
        %p2009 = scmp.lt.s32.totalorder %s14, 1
        %s2010 = scalar_select %p2009, %s14, 1
        %s2011 = smul.addr %s2010, 2
        %s2012 = smul.addr %s2011, 8
        %s2013 = scalar_lea.vmem %s2, %s2012
      $region40: #{nddr_cnn_forward.1} parent=35 // pred_fallthru
        _
    $region36: #{nddr_cnn_forward.1} parent=5 // pred_fallthru
      _
  $region6: #{nddr_cnn_forward.1} parent=0 // loop_footer
    %s12 = sadd.s32 1, %s8
  $region7: #{nddr_cnn_forward.1} parent=0 // loop_footer_branch
    %7 = sbr.rel target = $region3
  $region8: #{nddr_cnn_forward.1} parent=0 // loop_exit
    _

</llo_original>
